<compile_context>
chip_gen: v5e
topology: v5e:2x2
jax: 0.10.0
libtpu: 0.0.40
codegen_flags: <defaults>
</compile_context>

<pallas_src>
import jax
import jax.numpy as jnp
from jax import lax
from jax.experimental import pallas as pl
from jax.experimental.pallas import tpu as pltpu


def bilstm_classifier_kernel(xw_f_ref, xw_b_ref, whh_f_ref, whh_b_ref,
                             wc_f_ref, wc_b_ref, bc_ref, out_ref,
                             hf_ref, hb_ref):
    """Fused bidirectional LSTM recurrence + linear classifier.

    xw_f_ref / xw_b_ref : [T, B, 4H]  precomputed x@W_ih + (b_ih+b_hh), gate order i,f,g,o
    whh_f_ref/whh_b_ref : [H, 4H]     recurrent weights
    wc_f_ref / wc_b_ref : [H, C]      classifier weight split (top half / bottom half)
    bc_ref              : [1, C]      classifier bias
    out_ref             : [T, B, C]
    hf_ref / hb_ref     : VMEM scratch [T, B, H] hidden-state sequences.
    """
    T, B, _ = xw_f_ref.shape
    H = whh_f_ref.shape[0]
    C = wc_f_ref.shape[1]

    # Hoist weight loads out of the recurrence.
    whh_f = whh_f_ref[...]          # [H, 4H]
    whh_b = whh_b_ref[...]          # [H, 4H]

    def cell(gates, c):
        i_g = jax.nn.sigmoid(gates[:, 0 * H:1 * H])
        f_g = jax.nn.sigmoid(gates[:, 1 * H:2 * H])
        g_g = jnp.tanh(gates[:, 2 * H:3 * H])
        o_g = jax.nn.sigmoid(gates[:, 3 * H:4 * H])
        c_new = f_g * c + i_g * g_g
        h_new = o_g * jnp.tanh(c_new)
        return h_new, c_new

    def step(i, carry):
        hf, cf, hb, cb = carry
        tb = T - 1 - i
        # Per-step work: only the recurrent matmul + the precomputed input term.
        gates_f = xw_f_ref[i] + jnp.dot(hf, whh_f,
                                        preferred_element_type=jnp.float32)
        gates_b = xw_b_ref[tb] + jnp.dot(hb, whh_b,
                                         preferred_element_type=jnp.float32)
        hf_new, cf_new = cell(gates_f, cf)
        hb_new, cb_new = cell(gates_b, cb)
        hf_ref[i] = hf_new
        hb_ref[tb] = hb_new
        return (hf_new, cf_new, hb_new, cb_new)

    z = jnp.zeros((B, H), jnp.float32)
    # Short fixed trip count -> fully unroll for LLO scheduling visibility.
    lax.fori_loop(0, T, step, (z, z, z, z), unroll=True)

    # Classifier as two 2-D matmuls with M = T*B (no concat, no batched einsum).
    hf_flat = hf_ref[...].reshape(T * B, H)
    hb_flat = hb_ref[...].reshape(T * B, H)
    logits = (jnp.dot(hf_flat, wc_f_ref[...], preferred_element_type=jnp.float32)
              + jnp.dot(hb_flat, wc_b_ref[...], preferred_element_type=jnp.float32)
              + bc_ref[...])                                   # [T*B, C]
    out_ref[...] = logits.reshape(T, B, C).astype(out_ref.dtype)


def _full_spec(shape):
    return pl.BlockSpec(shape, lambda i, _n=len(shape): (0,) * _n)


def bilstm_crf_forward(unigrams, params):
    """Equivalent of BiLSTM_CRF.forward(unigrams). Returns tag_scores [B, T, C]."""
    # Embedding lookup (gather) in plain JAX.
    emb = jnp.take(params['embedding'], unigrams, axis=0).astype(jnp.float32)  # [B, T, E]

    # Hoisted input projection + bias, fused with the batch-first -> time-major
    # transpose so the kernel never sees E and no standalone transpose pass runs.
    xw_f = (jnp.einsum('bte,eg->tbg', emb, params['wih_f'],
                       preferred_element_type=jnp.float32) + params['b_f'])    # [T, B, 4H]
    xw_b = (jnp.einsum('bte,eg->tbg', emb, params['wih_b'],
                       preferred_element_type=jnp.float32) + params['b_b'])    # [T, B, 4H]

    T, B, _ = xw_f.shape
    H = params['whh_f'].shape[0]
    C = params['wc'].shape[1]

    # Split the classifier weight so the kernel can skip the [T,B,2H] concat.
    wc_f = params['wc'][:H]      # [H, C]
    wc_b = params['wc'][H:]      # [H, C]

    args = (xw_f, xw_b,
            params['whh_f'], params['whh_b'],
            wc_f, wc_b, params['bc'])

    out_tbc = pl.pallas_call(
        bilstm_classifier_kernel,
        out_shape=jax.ShapeDtypeStruct((T, B, C), jnp.float32),
        grid=(1,),
        in_specs=[_full_spec(a.shape) for a in args],
        out_specs=_full_spec((T, B, C)),
        scratch_shapes=[pltpu.VMEM((T, B, H), jnp.float32),
                        pltpu.VMEM((T, B, H), jnp.float32)],
        compiler_params=pltpu.CompilerParams(
            dimension_semantics=("arbitrary",)),
    )(*args)

    return jnp.transpose(out_tbc, (1, 0, 2))                   # [B, T, C]


# ----------------------- pure-JAX reference for verification -----------------------

def _lstm_dir_ref(x, wih, whh, b, reverse):
    T, B, _ = x.shape
    H = whh.shape[0]
    xs = x[::-1] if reverse else x

    def step(carry, xt):
        h, c = carry
        gates = xt @ wih + h @ whh + b
        i_g = jax.nn.sigmoid(gates[:, :H])
        f_g = jax.nn.sigmoid(gates[:, H:2 * H])
        g_g = jnp.tanh(gates[:, 2 * H:3 * H])
        o_g = jax.nn.sigmoid(gates[:, 3 * H:])
        c2 = f_g * c + i_g * g_g
        h2 = o_g * jnp.tanh(c2)
        return (h2, c2), h2

    h0 = jnp.zeros((B, H), jnp.float32)
    (_, _), hs = lax.scan(step, (h0, h0), xs)
    return hs[::-1] if reverse else hs


def bilstm_crf_ref(unigrams, params):
    emb = jnp.take(params['embedding'], unigrams, axis=0)
    x = jnp.transpose(emb, (1, 0, 2)).astype(jnp.float32)
    hf = _lstm_dir_ref(x, params['wih_f'], params['whh_f'], params['b_f'][0], False)
    hb = _lstm_dir_ref(x, params['wih_b'], params['whh_b'], params['b_b'][0], True)
    h = jnp.concatenate([hf, hb], axis=-1)
    out = jnp.einsum('tbh,hc->tbc', h, params['wc']) + params['bc'][0]
    return jnp.transpose(out, (1, 0, 2))


# ----------------------------------- main -----------------------------------

if __name__ == "__main__":
    # Module hyperparameters (small, consistent with the forward pass):
    vocab_size = 50
    embedding_size = 16     # E
    hidden_size = 32        # H
    target_size = 4         # C  (e.g. B/M/E/S tags for word segmentation)
    batch = 2               # B
    seq_len = 8             # T
    # num_layers = 1, lstm_drop_out = 0, nn_drop_out = 0 -> dropout is a no-op

    key = jax.random.PRNGKey(0)
    keys = jax.random.split(key, 12)

    def rnd(k, shape, scale=0.1):
        return (scale * jax.random.normal(k, shape)).astype(jnp.float32)

    H4 = 4 * hidden_size
    params = {
        'embedding': rnd(keys[0], (vocab_size, embedding_size), 1.0),
        # forward direction (PyTorch weight_*_l0, transposed; biases summed)
        'wih_f': rnd(keys[1], (embedding_size, H4)),
        'whh_f': rnd(keys[2], (hidden_size, H4)),
        'b_f':   rnd(keys[3], (1, H4)) + rnd(keys[4], (1, H4)),
        # backward direction (PyTorch weight_*_l0_reverse)
        'wih_b': rnd(keys[5], (embedding_size, H4)),
        'whh_b': rnd(keys[6], (hidden_size, H4)),
        'b_b':   rnd(keys[7], (1, H4)) + rnd(keys[8], (1, H4)),
        # classifier nn.Linear(2H, target_size), weight transposed to [2H, C]
        'wc': rnd(keys[9], (2 * hidden_size, target_size)),
        'bc': rnd(keys[10], (1, target_size)),
    }

    unigrams = jax.random.randint(keys[11], (batch, seq_len), 0, vocab_size,
                                  dtype=jnp.int32)

    tag_scores = jax.block_until_ready(bilstm_crf_forward(unigrams, params))
    ref_scores = jax.block_until_ready(bilstm_crf_ref(unigrams, params))

    assert tag_scores.shape == (batch, seq_len, target_size), tag_scores.shape
    assert jnp.allclose(tag_scores, ref_scores, rtol=1e-4, atol=1e-4), (
        float(jnp.max(jnp.abs(tag_scores - ref_scores))))

    print("KERNEL_OK")
</pallas_src>

<mosaic_0001>
module attributes {stable_mosaic.version = 11 : i64} {
  func.func @bilstm_classifier_kernel(%arg0: i32, %arg1: memref<8x2x128xf32, #tpu.memory_space<vmem>>, %arg2: memref<8x2x128xf32, #tpu.memory_space<vmem>>, %arg3: memref<32x128xf32, #tpu.memory_space<vmem>>, %arg4: memref<32x128xf32, #tpu.memory_space<vmem>>, %arg5: memref<32x4xf32, #tpu.memory_space<vmem>>, %arg6: memref<32x4xf32, #tpu.memory_space<vmem>>, %arg7: memref<1x4xf32, #tpu.memory_space<vmem>>, %arg8: memref<8x2x4xf32, #tpu.memory_space<vmem>>, %arg9: memref<8x2x32xf32, #tpu.memory_space<vmem>>, %arg10: memref<8x2x32xf32, #tpu.memory_space<vmem>>) attributes {dimension_semantics = [#tpu.dimension_semantics<arbitrary>], iteration_bounds = array<i64: 1>, scalar_prefetch = 0 : i64, scratch_operands = 2 : i64, tpu.core_type = #tpu.core_type<tc>, window_params = [{pipeline_mode = #tpu.pipeline_mode<synchronous>, transform_indices = @transform_0, window_bounds = array<i64: 8, 2, 128>}, {pipeline_mode = #tpu.pipeline_mode<synchronous>, transform_indices = @transform_1, window_bounds = array<i64: 8, 2, 128>}, {pipeline_mode = #tpu.pipeline_mode<synchronous>, transform_indices = @transform_2, window_bounds = array<i64: 32, 128>}, {pipeline_mode = #tpu.pipeline_mode<synchronous>, transform_indices = @transform_3, window_bounds = array<i64: 32, 128>}, {pipeline_mode = #tpu.pipeline_mode<synchronous>, transform_indices = @transform_4, window_bounds = array<i64: 32, 4>}, {pipeline_mode = #tpu.pipeline_mode<synchronous>, transform_indices = @transform_5, window_bounds = array<i64: 32, 4>}, {pipeline_mode = #tpu.pipeline_mode<synchronous>, transform_indices = @transform_6, window_bounds = array<i64: 1, 4>}, {pipeline_mode = #tpu.pipeline_mode<synchronous>, transform_indices = @transform_7, window_bounds = array<i64: 8, 2, 4>}]} {
    %c0 = arith.constant 0 : index
    %c0_0 = arith.constant 0 : index
    %0 = vector.load %arg3[%c0, %c0_0] : memref<32x128xf32, #tpu.memory_space<vmem>>, vector<32x128xf32>
    %c0_1 = arith.constant 0 : index
    %c0_2 = arith.constant 0 : index
    %1 = vector.load %arg4[%c0_1, %c0_2] : memref<32x128xf32, #tpu.memory_space<vmem>>, vector<32x128xf32>
    %cst = arith.constant 0.000000e+00 : f32
    %2 = vector.broadcast %cst : f32 to vector<2x32xf32>
    %c0_i32 = arith.constant 0 : i32
    %c7_i32 = arith.constant 7 : i32
    %3 = arith.subi %c7_i32, %c0_i32 : i32
    %4 = arith.index_cast %c0_i32 : i32 to index
    %c0_3 = arith.constant 0 : index
    %c0_4 = arith.constant 0 : index
    %5 = vector.load %arg1[%4, %c0_3, %c0_4] : memref<8x2x128xf32, #tpu.memory_space<vmem>>, vector<1x2x128xf32>
    %6 = vector.shape_cast %5 : vector<1x2x128xf32> to vector<2x128xf32>
    %cst_5 = arith.constant dense<0.000000e+00> : vector<2x128xf32>
    %7 = tpu.matmul %2, %0, %cst_5 {dimension_numbers = #tpu.dot_dimension_numbers<[1], [0], [0], [1], [0, 0, 1, 1], [], []>} : vector<2x32xf32>, vector<32x128xf32>, vector<2x128xf32> -> vector<2x128xf32>
    %8 = arith.addf %6, %7 : vector<2x128xf32>
    %9 = arith.index_cast %3 : i32 to index
    %c0_6 = arith.constant 0 : index
    %c0_7 = arith.constant 0 : index
    %10 = vector.load %arg2[%9, %c0_6, %c0_7] : memref<8x2x128xf32, #tpu.memory_space<vmem>>, vector<1x2x128xf32>
    %11 = vector.shape_cast %10 : vector<1x2x128xf32> to vector<2x128xf32>
    %cst_8 = arith.constant dense<0.000000e+00> : vector<2x128xf32>
    %12 = tpu.matmul %2, %1, %cst_8 {dimension_numbers = #tpu.dot_dimension_numbers<[1], [0], [0], [1], [0, 0, 1, 1], [], []>} : vector<2x32xf32>, vector<32x128xf32>, vector<2x128xf32> -> vector<2x128xf32>
    %13 = arith.addf %11, %12 : vector<2x128xf32>
    %14 = vector.extract_strided_slice %8 {offsets = [0, 0], sizes = [2, 32], strides = [1, 1]} : vector<2x128xf32> to vector<2x32xf32>
    %15 = arith.negf %14 : vector<2x32xf32>
    %16 = math.exp %15 : vector<2x32xf32>
    %cst_9 = arith.constant 1.000000e+00 : f32
    %17 = vector.broadcast %cst_9 : f32 to vector<2x32xf32>
    %18 = arith.addf %17, %16 : vector<2x32xf32>
    %19 = arith.divf %17, %18 : vector<2x32xf32>
    %20 = vector.extract_strided_slice %8 {offsets = [0, 32], sizes = [2, 32], strides = [1, 1]} : vector<2x128xf32> to vector<2x32xf32>
    %21 = arith.negf %20 : vector<2x32xf32>
    %22 = math.exp %21 : vector<2x32xf32>
    %cst_10 = arith.constant 1.000000e+00 : f32
    %23 = vector.broadcast %cst_10 : f32 to vector<2x32xf32>
    %24 = arith.addf %23, %22 : vector<2x32xf32>
    %25 = arith.divf %23, %24 : vector<2x32xf32>
    %26 = vector.extract_strided_slice %8 {offsets = [0, 64], sizes = [2, 32], strides = [1, 1]} : vector<2x128xf32> to vector<2x32xf32>
    %27 = math.tanh %26 : vector<2x32xf32>
    %28 = vector.extract_strided_slice %8 {offsets = [0, 96], sizes = [2, 32], strides = [1, 1]} : vector<2x128xf32> to vector<2x32xf32>
    %29 = arith.negf %28 : vector<2x32xf32>
    %30 = math.exp %29 : vector<2x32xf32>
    %cst_11 = arith.constant 1.000000e+00 : f32
    %31 = vector.broadcast %cst_11 : f32 to vector<2x32xf32>
    %32 = arith.addf %31, %30 : vector<2x32xf32>
    %33 = arith.divf %31, %32 : vector<2x32xf32>
    %34 = arith.mulf %25, %2 : vector<2x32xf32>
    %35 = arith.mulf %19, %27 : vector<2x32xf32>
    %36 = arith.addf %34, %35 : vector<2x32xf32>
    %37 = math.tanh %36 : vector<2x32xf32>
    %38 = arith.mulf %33, %37 : vector<2x32xf32>
    %39 = vector.extract_strided_slice %13 {offsets = [0, 0], sizes = [2, 32], strides = [1, 1]} : vector<2x128xf32> to vector<2x32xf32>
    %40 = arith.negf %39 : vector<2x32xf32>
    %41 = math.exp %40 : vector<2x32xf32>
    %cst_12 = arith.constant 1.000000e+00 : f32
    %42 = vector.broadcast %cst_12 : f32 to vector<2x32xf32>
    %43 = arith.addf %42, %41 : vector<2x32xf32>
    %44 = arith.divf %42, %43 : vector<2x32xf32>
    %45 = vector.extract_strided_slice %13 {offsets = [0, 32], sizes = [2, 32], strides = [1, 1]} : vector<2x128xf32> to vector<2x32xf32>
    %46 = arith.negf %45 : vector<2x32xf32>
    %47 = math.exp %46 : vector<2x32xf32>
    %cst_13 = arith.constant 1.000000e+00 : f32
    %48 = vector.broadcast %cst_13 : f32 to vector<2x32xf32>
    %49 = arith.addf %48, %47 : vector<2x32xf32>
    %50 = arith.divf %48, %49 : vector<2x32xf32>
    %51 = vector.extract_strided_slice %13 {offsets = [0, 64], sizes = [2, 32], strides = [1, 1]} : vector<2x128xf32> to vector<2x32xf32>
    %52 = math.tanh %51 : vector<2x32xf32>
    %53 = vector.extract_strided_slice %13 {offsets = [0, 96], sizes = [2, 32], strides = [1, 1]} : vector<2x128xf32> to vector<2x32xf32>
    %54 = arith.negf %53 : vector<2x32xf32>
    %55 = math.exp %54 : vector<2x32xf32>
    %cst_14 = arith.constant 1.000000e+00 : f32
    %56 = vector.broadcast %cst_14 : f32 to vector<2x32xf32>
    %57 = arith.addf %56, %55 : vector<2x32xf32>
    %58 = arith.divf %56, %57 : vector<2x32xf32>
    %59 = arith.mulf %50, %2 : vector<2x32xf32>
    %60 = arith.mulf %44, %52 : vector<2x32xf32>
    %61 = arith.addf %59, %60 : vector<2x32xf32>
    %62 = math.tanh %61 : vector<2x32xf32>
    %63 = arith.mulf %58, %62 : vector<2x32xf32>
    %64 = arith.index_cast %c0_i32 : i32 to index
    %c0_15 = arith.constant 0 : index
    %c0_16 = arith.constant 0 : index
    %65 = vector.load %arg9[%64, %c0_15, %c0_16] : memref<8x2x32xf32, #tpu.memory_space<vmem>>, vector<1x2x32xf32>
    %66 = vector.shape_cast %65 : vector<1x2x32xf32> to vector<2x32xf32>
    %67 = vector.shape_cast %38 : vector<2x32xf32> to vector<1x2x32xf32>
    tpu.vector_store %arg9[%64, %c0_15, %c0_16], %67 {strides = array<i32>} : memref<8x2x32xf32, #tpu.memory_space<vmem>>, vector<1x2x32xf32>,
    %68 = arith.index_cast %3 : i32 to index
    %c0_17 = arith.constant 0 : index
    %c0_18 = arith.constant 0 : index
    %69 = vector.load %arg10[%68, %c0_17, %c0_18] : memref<8x2x32xf32, #tpu.memory_space<vmem>>, vector<1x2x32xf32>
    %70 = vector.shape_cast %69 : vector<1x2x32xf32> to vector<2x32xf32>
    %71 = vector.shape_cast %63 : vector<2x32xf32> to vector<1x2x32xf32>
    tpu.vector_store %arg10[%68, %c0_17, %c0_18], %71 {strides = array<i32>} : memref<8x2x32xf32, #tpu.memory_space<vmem>>, vector<1x2x32xf32>,
    %c1_i32 = arith.constant 1 : i32
    %c7_i32_19 = arith.constant 7 : i32
    %72 = arith.subi %c7_i32_19, %c1_i32 : i32
    %73 = arith.index_cast %c1_i32 : i32 to index
    %c0_20 = arith.constant 0 : index
    %c0_21 = arith.constant 0 : index
    %74 = vector.load %arg1[%73, %c0_20, %c0_21] : memref<8x2x128xf32, #tpu.memory_space<vmem>>, vector<1x2x128xf32>
    %75 = vector.shape_cast %74 : vector<1x2x128xf32> to vector<2x128xf32>
    %cst_22 = arith.constant dense<0.000000e+00> : vector<2x128xf32>
    %76 = tpu.matmul %38, %0, %cst_22 {dimension_numbers = #tpu.dot_dimension_numbers<[1], [0], [0], [1], [0, 0, 1, 1], [], []>} : vector<2x32xf32>, vector<32x128xf32>, vector<2x128xf32> -> vector<2x128xf32>
    %77 = arith.addf %75, %76 : vector<2x128xf32>
    %78 = arith.index_cast %72 : i32 to index
    %c0_23 = arith.constant 0 : index
    %c0_24 = arith.constant 0 : index
    %79 = vector.load %arg2[%78, %c0_23, %c0_24] : memref<8x2x128xf32, #tpu.memory_space<vmem>>, vector<1x2x128xf32>
    %80 = vector.shape_cast %79 : vector<1x2x128xf32> to vector<2x128xf32>
    %cst_25 = arith.constant dense<0.000000e+00> : vector<2x128xf32>
    %81 = tpu.matmul %63, %1, %cst_25 {dimension_numbers = #tpu.dot_dimension_numbers<[1], [0], [0], [1], [0, 0, 1, 1], [], []>} : vector<2x32xf32>, vector<32x128xf32>, vector<2x128xf32> -> vector<2x128xf32>
    %82 = arith.addf %80, %81 : vector<2x128xf32>
    %83 = vector.extract_strided_slice %77 {offsets = [0, 0], sizes = [2, 32], strides = [1, 1]} : vector<2x128xf32> to vector<2x32xf32>
    %84 = arith.negf %83 : vector<2x32xf32>
    %85 = math.exp %84 : vector<2x32xf32>
    %cst_26 = arith.constant 1.000000e+00 : f32
    %86 = vector.broadcast %cst_26 : f32 to vector<2x32xf32>
    %87 = arith.addf %86, %85 : vector<2x32xf32>
    %88 = arith.divf %86, %87 : vector<2x32xf32>
    %89 = vector.extract_strided_slice %77 {offsets = [0, 32], sizes = [2, 32], strides = [1, 1]} : vector<2x128xf32> to vector<2x32xf32>
    %90 = arith.negf %89 : vector<2x32xf32>
    %91 = math.exp %90 : vector<2x32xf32>
    %cst_27 = arith.constant 1.000000e+00 : f32
    %92 = vector.broadcast %cst_27 : f32 to vector<2x32xf32>
    %93 = arith.addf %92, %91 : vector<2x32xf32>
    %94 = arith.divf %92, %93 : vector<2x32xf32>
    %95 = vector.extract_strided_slice %77 {offsets = [0, 64], sizes = [2, 32], strides = [1, 1]} : vector<2x128xf32> to vector<2x32xf32>
    %96 = math.tanh %95 : vector<2x32xf32>
    %97 = vector.extract_strided_slice %77 {offsets = [0, 96], sizes = [2, 32], strides = [1, 1]} : vector<2x128xf32> to vector<2x32xf32>
    %98 = arith.negf %97 : vector<2x32xf32>
    %99 = math.exp %98 : vector<2x32xf32>
    %cst_28 = arith.constant 1.000000e+00 : f32
    %100 = vector.broadcast %cst_28 : f32 to vector<2x32xf32>
    %101 = arith.addf %100, %99 : vector<2x32xf32>
    %102 = arith.divf %100, %101 : vector<2x32xf32>
    %103 = arith.mulf %94, %36 : vector<2x32xf32>
    %104 = arith.mulf %88, %96 : vector<2x32xf32>
    %105 = arith.addf %103, %104 : vector<2x32xf32>
    %106 = math.tanh %105 : vector<2x32xf32>
    %107 = arith.mulf %102, %106 : vector<2x32xf32>
    %108 = vector.extract_strided_slice %82 {offsets = [0, 0], sizes = [2, 32], strides = [1, 1]} : vector<2x128xf32> to vector<2x32xf32>
    %109 = arith.negf %108 : vector<2x32xf32>
    %110 = math.exp %109 : vector<2x32xf32>
    %cst_29 = arith.constant 1.000000e+00 : f32
    %111 = vector.broadcast %cst_29 : f32 to vector<2x32xf32>
    %112 = arith.addf %111, %110 : vector<2x32xf32>
    %113 = arith.divf %111, %112 : vector<2x32xf32>
    %114 = vector.extract_strided_slice %82 {offsets = [0, 32], sizes = [2, 32], strides = [1, 1]} : vector<2x128xf32> to vector<2x32xf32>
    %115 = arith.negf %114 : vector<2x32xf32>
    %116 = math.exp %115 : vector<2x32xf32>
    %cst_30 = arith.constant 1.000000e+00 : f32
    %117 = vector.broadcast %cst_30 : f32 to vector<2x32xf32>
    %118 = arith.addf %117, %116 : vector<2x32xf32>
    %119 = arith.divf %117, %118 : vector<2x32xf32>
    %120 = vector.extract_strided_slice %82 {offsets = [0, 64], sizes = [2, 32], strides = [1, 1]} : vector<2x128xf32> to vector<2x32xf32>
    %121 = math.tanh %120 : vector<2x32xf32>
    %122 = vector.extract_strided_slice %82 {offsets = [0, 96], sizes = [2, 32], strides = [1, 1]} : vector<2x128xf32> to vector<2x32xf32>
    %123 = arith.negf %122 : vector<2x32xf32>
    %124 = math.exp %123 : vector<2x32xf32>
    %cst_31 = arith.constant 1.000000e+00 : f32
    %125 = vector.broadcast %cst_31 : f32 to vector<2x32xf32>
    %126 = arith.addf %125, %124 : vector<2x32xf32>
    %127 = arith.divf %125, %126 : vector<2x32xf32>
    %128 = arith.mulf %119, %61 : vector<2x32xf32>
    %129 = arith.mulf %113, %121 : vector<2x32xf32>
    %130 = arith.addf %128, %129 : vector<2x32xf32>
    %131 = math.tanh %130 : vector<2x32xf32>
    %132 = arith.mulf %127, %131 : vector<2x32xf32>
    %133 = arith.index_cast %c1_i32 : i32 to index
    %c0_32 = arith.constant 0 : index
    %c0_33 = arith.constant 0 : index
    %134 = vector.load %arg9[%133, %c0_32, %c0_33] : memref<8x2x32xf32, #tpu.memory_space<vmem>>, vector<1x2x32xf32>
    %135 = vector.shape_cast %134 : vector<1x2x32xf32> to vector<2x32xf32>
    %136 = vector.shape_cast %107 : vector<2x32xf32> to vector<1x2x32xf32>
    tpu.vector_store %arg9[%133, %c0_32, %c0_33], %136 {strides = array<i32>} : memref<8x2x32xf32, #tpu.memory_space<vmem>>, vector<1x2x32xf32>,
    %137 = arith.index_cast %72 : i32 to index
    %c0_34 = arith.constant 0 : index
    %c0_35 = arith.constant 0 : index
    %138 = vector.load %arg10[%137, %c0_34, %c0_35] : memref<8x2x32xf32, #tpu.memory_space<vmem>>, vector<1x2x32xf32>
    %139 = vector.shape_cast %138 : vector<1x2x32xf32> to vector<2x32xf32>
    %140 = vector.shape_cast %132 : vector<2x32xf32> to vector<1x2x32xf32>
    tpu.vector_store %arg10[%137, %c0_34, %c0_35], %140 {strides = array<i32>} : memref<8x2x32xf32, #tpu.memory_space<vmem>>, vector<1x2x32xf32>,
    %c2_i32 = arith.constant 2 : i32
    %c7_i32_36 = arith.constant 7 : i32
    %141 = arith.subi %c7_i32_36, %c2_i32 : i32
    %142 = arith.index_cast %c2_i32 : i32 to index
    %c0_37 = arith.constant 0 : index
    %c0_38 = arith.constant 0 : index
    %143 = vector.load %arg1[%142, %c0_37, %c0_38] : memref<8x2x128xf32, #tpu.memory_space<vmem>>, vector<1x2x128xf32>
    %144 = vector.shape_cast %143 : vector<1x2x128xf32> to vector<2x128xf32>
    %cst_39 = arith.constant dense<0.000000e+00> : vector<2x128xf32>
    %145 = tpu.matmul %107, %0, %cst_39 {dimension_numbers = #tpu.dot_dimension_numbers<[1], [0], [0], [1], [0, 0, 1, 1], [], []>} : vector<2x32xf32>, vector<32x128xf32>, vector<2x128xf32> -> vector<2x128xf32>
    %146 = arith.addf %144, %145 : vector<2x128xf32>
    %147 = arith.index_cast %141 : i32 to index
    %c0_40 = arith.constant 0 : index
    %c0_41 = arith.constant 0 : index
    %148 = vector.load %arg2[%147, %c0_40, %c0_41] : memref<8x2x128xf32, #tpu.memory_space<vmem>>, vector<1x2x128xf32>
    %149 = vector.shape_cast %148 : vector<1x2x128xf32> to vector<2x128xf32>
    %cst_42 = arith.constant dense<0.000000e+00> : vector<2x128xf32>
    %150 = tpu.matmul %132, %1, %cst_42 {dimension_numbers = #tpu.dot_dimension_numbers<[1], [0], [0], [1], [0, 0, 1, 1], [], []>} : vector<2x32xf32>, vector<32x128xf32>, vector<2x128xf32> -> vector<2x128xf32>
    %151 = arith.addf %149, %150 : vector<2x128xf32>
    %152 = vector.extract_strided_slice %146 {offsets = [0, 0], sizes = [2, 32], strides = [1, 1]} : vector<2x128xf32> to vector<2x32xf32>
    %153 = arith.negf %152 : vector<2x32xf32>
    %154 = math.exp %153 : vector<2x32xf32>
    %cst_43 = arith.constant 1.000000e+00 : f32
    %155 = vector.broadcast %cst_43 : f32 to vector<2x32xf32>
    %156 = arith.addf %155, %154 : vector<2x32xf32>
    %157 = arith.divf %155, %156 : vector<2x32xf32>
    %158 = vector.extract_strided_slice %146 {offsets = [0, 32], sizes = [2, 32], strides = [1, 1]} : vector<2x128xf32> to vector<2x32xf32>
    %159 = arith.negf %158 : vector<2x32xf32>
    %160 = math.exp %159 : vector<2x32xf32>
    %cst_44 = arith.constant 1.000000e+00 : f32
    %161 = vector.broadcast %cst_44 : f32 to vector<2x32xf32>
    %162 = arith.addf %161, %160 : vector<2x32xf32>
    %163 = arith.divf %161, %162 : vector<2x32xf32>
    %164 = vector.extract_strided_slice %146 {offsets = [0, 64], sizes = [2, 32], strides = [1, 1]} : vector<2x128xf32> to vector<2x32xf32>
    %165 = math.tanh %164 : vector<2x32xf32>
    %166 = vector.extract_strided_slice %146 {offsets = [0, 96], sizes = [2, 32], strides = [1, 1]} : vector<2x128xf32> to vector<2x32xf32>
    %167 = arith.negf %166 : vector<2x32xf32>
    %168 = math.exp %167 : vector<2x32xf32>
    %cst_45 = arith.constant 1.000000e+00 : f32
    %169 = vector.broadcast %cst_45 : f32 to vector<2x32xf32>
    %170 = arith.addf %169, %168 : vector<2x32xf32>
    %171 = arith.divf %169, %170 : vector<2x32xf32>
    %172 = arith.mulf %163, %105 : vector<2x32xf32>
    %173 = arith.mulf %157, %165 : vector<2x32xf32>
    %174 = arith.addf %172, %173 : vector<2x32xf32>
    %175 = math.tanh %174 : vector<2x32xf32>
    %176 = arith.mulf %171, %175 : vector<2x32xf32>
    %177 = vector.extract_strided_slice %151 {offsets = [0, 0], sizes = [2, 32], strides = [1, 1]} : vector<2x128xf32> to vector<2x32xf32>
    %178 = arith.negf %177 : vector<2x32xf32>
    %179 = math.exp %178 : vector<2x32xf32>
    %cst_46 = arith.constant 1.000000e+00 : f32
    %180 = vector.broadcast %cst_46 : f32 to vector<2x32xf32>
    %181 = arith.addf %180, %179 : vector<2x32xf32>
    %182 = arith.divf %180, %181 : vector<2x32xf32>
    %183 = vector.extract_strided_slice %151 {offsets = [0, 32], sizes = [2, 32], strides = [1, 1]} : vector<2x128xf32> to vector<2x32xf32>
    %184 = arith.negf %183 : vector<2x32xf32>
    %185 = math.exp %184 : vector<2x32xf32>
    %cst_47 = arith.constant 1.000000e+00 : f32
    %186 = vector.broadcast %cst_47 : f32 to vector<2x32xf32>
    %187 = arith.addf %186, %185 : vector<2x32xf32>
    %188 = arith.divf %186, %187 : vector<2x32xf32>
    %189 = vector.extract_strided_slice %151 {offsets = [0, 64], sizes = [2, 32], strides = [1, 1]} : vector<2x128xf32> to vector<2x32xf32>
    %190 = math.tanh %189 : vector<2x32xf32>
    %191 = vector.extract_strided_slice %151 {offsets = [0, 96], sizes = [2, 32], strides = [1, 1]} : vector<2x128xf32> to vector<2x32xf32>
    %192 = arith.negf %191 : vector<2x32xf32>
    %193 = math.exp %192 : vector<2x32xf32>
    %cst_48 = arith.constant 1.000000e+00 : f32
    %194 = vector.broadcast %cst_48 : f32 to vector<2x32xf32>
    %195 = arith.addf %194, %193 : vector<2x32xf32>
    %196 = arith.divf %194, %195 : vector<2x32xf32>
    %197 = arith.mulf %188, %130 : vector<2x32xf32>
    %198 = arith.mulf %182, %190 : vector<2x32xf32>
    %199 = arith.addf %197, %198 : vector<2x32xf32>
    %200 = math.tanh %199 : vector<2x32xf32>
    %201 = arith.mulf %196, %200 : vector<2x32xf32>
    %202 = arith.index_cast %c2_i32 : i32 to index
    %c0_49 = arith.constant 0 : index
    %c0_50 = arith.constant 0 : index
    %203 = vector.load %arg9[%202, %c0_49, %c0_50] : memref<8x2x32xf32, #tpu.memory_space<vmem>>, vector<1x2x32xf32>
    %204 = vector.shape_cast %203 : vector<1x2x32xf32> to vector<2x32xf32>
    %205 = vector.shape_cast %176 : vector<2x32xf32> to vector<1x2x32xf32>
    tpu.vector_store %arg9[%202, %c0_49, %c0_50], %205 {strides = array<i32>} : memref<8x2x32xf32, #tpu.memory_space<vmem>>, vector<1x2x32xf32>,
    %206 = arith.index_cast %141 : i32 to index
    %c0_51 = arith.constant 0 : index
    %c0_52 = arith.constant 0 : index
    %207 = vector.load %arg10[%206, %c0_51, %c0_52] : memref<8x2x32xf32, #tpu.memory_space<vmem>>, vector<1x2x32xf32>
    %208 = vector.shape_cast %207 : vector<1x2x32xf32> to vector<2x32xf32>
    %209 = vector.shape_cast %201 : vector<2x32xf32> to vector<1x2x32xf32>
    tpu.vector_store %arg10[%206, %c0_51, %c0_52], %209 {strides = array<i32>} : memref<8x2x32xf32, #tpu.memory_space<vmem>>, vector<1x2x32xf32>,
    %c3_i32 = arith.constant 3 : i32
    %c7_i32_53 = arith.constant 7 : i32
    %210 = arith.subi %c7_i32_53, %c3_i32 : i32
    %211 = arith.index_cast %c3_i32 : i32 to index
    %c0_54 = arith.constant 0 : index
    %c0_55 = arith.constant 0 : index
    %212 = vector.load %arg1[%211, %c0_54, %c0_55] : memref<8x2x128xf32, #tpu.memory_space<vmem>>, vector<1x2x128xf32>
    %213 = vector.shape_cast %212 : vector<1x2x128xf32> to vector<2x128xf32>
    %cst_56 = arith.constant dense<0.000000e+00> : vector<2x128xf32>
    %214 = tpu.matmul %176, %0, %cst_56 {dimension_numbers = #tpu.dot_dimension_numbers<[1], [0], [0], [1], [0, 0, 1, 1], [], []>} : vector<2x32xf32>, vector<32x128xf32>, vector<2x128xf32> -> vector<2x128xf32>
    %215 = arith.addf %213, %214 : vector<2x128xf32>
    %216 = arith.index_cast %210 : i32 to index
    %c0_57 = arith.constant 0 : index
    %c0_58 = arith.constant 0 : index
    %217 = vector.load %arg2[%216, %c0_57, %c0_58] : memref<8x2x128xf32, #tpu.memory_space<vmem>>, vector<1x2x128xf32>
    %218 = vector.shape_cast %217 : vector<1x2x128xf32> to vector<2x128xf32>
    %cst_59 = arith.constant dense<0.000000e+00> : vector<2x128xf32>
    %219 = tpu.matmul %201, %1, %cst_59 {dimension_numbers = #tpu.dot_dimension_numbers<[1], [0], [0], [1], [0, 0, 1, 1], [], []>} : vector<2x32xf32>, vector<32x128xf32>, vector<2x128xf32> -> vector<2x128xf32>
    %220 = arith.addf %218, %219 : vector<2x128xf32>
    %221 = vector.extract_strided_slice %215 {offsets = [0, 0], sizes = [2, 32], strides = [1, 1]} : vector<2x128xf32> to vector<2x32xf32>
    %222 = arith.negf %221 : vector<2x32xf32>
    %223 = math.exp %222 : vector<2x32xf32>
    %cst_60 = arith.constant 1.000000e+00 : f32
    %224 = vector.broadcast %cst_60 : f32 to vector<2x32xf32>
    %225 = arith.addf %224, %223 : vector<2x32xf32>
    %226 = arith.divf %224, %225 : vector<2x32xf32>
    %227 = vector.extract_strided_slice %215 {offsets = [0, 32], sizes = [2, 32], strides = [1, 1]} : vector<2x128xf32> to vector<2x32xf32>
    %228 = arith.negf %227 : vector<2x32xf32>
    %229 = math.exp %228 : vector<2x32xf32>
    %cst_61 = arith.constant 1.000000e+00 : f32
    %230 = vector.broadcast %cst_61 : f32 to vector<2x32xf32>
    %231 = arith.addf %230, %229 : vector<2x32xf32>
    %232 = arith.divf %230, %231 : vector<2x32xf32>
    %233 = vector.extract_strided_slice %215 {offsets = [0, 64], sizes = [2, 32], strides = [1, 1]} : vector<2x128xf32> to vector<2x32xf32>
    %234 = math.tanh %233 : vector<2x32xf32>
    %235 = vector.extract_strided_slice %215 {offsets = [0, 96], sizes = [2, 32], strides = [1, 1]} : vector<2x128xf32> to vector<2x32xf32>
    %236 = arith.negf %235 : vector<2x32xf32>
    %237 = math.exp %236 : vector<2x32xf32>
    %cst_62 = arith.constant 1.000000e+00 : f32
    %238 = vector.broadcast %cst_62 : f32 to vector<2x32xf32>
    %239 = arith.addf %238, %237 : vector<2x32xf32>
    %240 = arith.divf %238, %239 : vector<2x32xf32>
    %241 = arith.mulf %232, %174 : vector<2x32xf32>
    %242 = arith.mulf %226, %234 : vector<2x32xf32>
    %243 = arith.addf %241, %242 : vector<2x32xf32>
    %244 = math.tanh %243 : vector<2x32xf32>
    %245 = arith.mulf %240, %244 : vector<2x32xf32>
    %246 = vector.extract_strided_slice %220 {offsets = [0, 0], sizes = [2, 32], strides = [1, 1]} : vector<2x128xf32> to vector<2x32xf32>
    %247 = arith.negf %246 : vector<2x32xf32>
    %248 = math.exp %247 : vector<2x32xf32>
    %cst_63 = arith.constant 1.000000e+00 : f32
    %249 = vector.broadcast %cst_63 : f32 to vector<2x32xf32>
    %250 = arith.addf %249, %248 : vector<2x32xf32>
    %251 = arith.divf %249, %250 : vector<2x32xf32>
    %252 = vector.extract_strided_slice %220 {offsets = [0, 32], sizes = [2, 32], strides = [1, 1]} : vector<2x128xf32> to vector<2x32xf32>
    %253 = arith.negf %252 : vector<2x32xf32>
    %254 = math.exp %253 : vector<2x32xf32>
    %cst_64 = arith.constant 1.000000e+00 : f32
    %255 = vector.broadcast %cst_64 : f32 to vector<2x32xf32>
    %256 = arith.addf %255, %254 : vector<2x32xf32>
    %257 = arith.divf %255, %256 : vector<2x32xf32>
    %258 = vector.extract_strided_slice %220 {offsets = [0, 64], sizes = [2, 32], strides = [1, 1]} : vector<2x128xf32> to vector<2x32xf32>
    %259 = math.tanh %258 : vector<2x32xf32>
    %260 = vector.extract_strided_slice %220 {offsets = [0, 96], sizes = [2, 32], strides = [1, 1]} : vector<2x128xf32> to vector<2x32xf32>
    %261 = arith.negf %260 : vector<2x32xf32>
    %262 = math.exp %261 : vector<2x32xf32>
    %cst_65 = arith.constant 1.000000e+00 : f32
    %263 = vector.broadcast %cst_65 : f32 to vector<2x32xf32>
    %264 = arith.addf %263, %262 : vector<2x32xf32>
    %265 = arith.divf %263, %264 : vector<2x32xf32>
    %266 = arith.mulf %257, %199 : vector<2x32xf32>
    %267 = arith.mulf %251, %259 : vector<2x32xf32>
    %268 = arith.addf %266, %267 : vector<2x32xf32>
    %269 = math.tanh %268 : vector<2x32xf32>
    %270 = arith.mulf %265, %269 : vector<2x32xf32>
    %271 = arith.index_cast %c3_i32 : i32 to index
    %c0_66 = arith.constant 0 : index
    %c0_67 = arith.constant 0 : index
    %272 = vector.load %arg9[%271, %c0_66, %c0_67] : memref<8x2x32xf32, #tpu.memory_space<vmem>>, vector<1x2x32xf32>
    %273 = vector.shape_cast %272 : vector<1x2x32xf32> to vector<2x32xf32>
    %274 = vector.shape_cast %245 : vector<2x32xf32> to vector<1x2x32xf32>
    tpu.vector_store %arg9[%271, %c0_66, %c0_67], %274 {strides = array<i32>} : memref<8x2x32xf32, #tpu.memory_space<vmem>>, vector<1x2x32xf32>,
    %275 = arith.index_cast %210 : i32 to index
    %c0_68 = arith.constant 0 : index
    %c0_69 = arith.constant 0 : index
    %276 = vector.load %arg10[%275, %c0_68, %c0_69] : memref<8x2x32xf32, #tpu.memory_space<vmem>>, vector<1x2x32xf32>
    %277 = vector.shape_cast %276 : vector<1x2x32xf32> to vector<2x32xf32>
    %278 = vector.shape_cast %270 : vector<2x32xf32> to vector<1x2x32xf32>
    tpu.vector_store %arg10[%275, %c0_68, %c0_69], %278 {strides = array<i32>} : memref<8x2x32xf32, #tpu.memory_space<vmem>>, vector<1x2x32xf32>,
    %c4_i32 = arith.constant 4 : i32
    %c7_i32_70 = arith.constant 7 : i32
    %279 = arith.subi %c7_i32_70, %c4_i32 : i32
    %280 = arith.index_cast %c4_i32 : i32 to index
    %c0_71 = arith.constant 0 : index
    %c0_72 = arith.constant 0 : index
    %281 = vector.load %arg1[%280, %c0_71, %c0_72] : memref<8x2x128xf32, #tpu.memory_space<vmem>>, vector<1x2x128xf32>
    %282 = vector.shape_cast %281 : vector<1x2x128xf32> to vector<2x128xf32>
    %cst_73 = arith.constant dense<0.000000e+00> : vector<2x128xf32>
    %283 = tpu.matmul %245, %0, %cst_73 {dimension_numbers = #tpu.dot_dimension_numbers<[1], [0], [0], [1], [0, 0, 1, 1], [], []>} : vector<2x32xf32>, vector<32x128xf32>, vector<2x128xf32> -> vector<2x128xf32>
    %284 = arith.addf %282, %283 : vector<2x128xf32>
    %285 = arith.index_cast %279 : i32 to index
    %c0_74 = arith.constant 0 : index
    %c0_75 = arith.constant 0 : index
    %286 = vector.load %arg2[%285, %c0_74, %c0_75] : memref<8x2x128xf32, #tpu.memory_space<vmem>>, vector<1x2x128xf32>
    %287 = vector.shape_cast %286 : vector<1x2x128xf32> to vector<2x128xf32>
    %cst_76 = arith.constant dense<0.000000e+00> : vector<2x128xf32>
    %288 = tpu.matmul %270, %1, %cst_76 {dimension_numbers = #tpu.dot_dimension_numbers<[1], [0], [0], [1], [0, 0, 1, 1], [], []>} : vector<2x32xf32>, vector<32x128xf32>, vector<2x128xf32> -> vector<2x128xf32>
    %289 = arith.addf %287, %288 : vector<2x128xf32>
    %290 = vector.extract_strided_slice %284 {offsets = [0, 0], sizes = [2, 32], strides = [1, 1]} : vector<2x128xf32> to vector<2x32xf32>
    %291 = arith.negf %290 : vector<2x32xf32>
    %292 = math.exp %291 : vector<2x32xf32>
    %cst_77 = arith.constant 1.000000e+00 : f32
    %293 = vector.broadcast %cst_77 : f32 to vector<2x32xf32>
    %294 = arith.addf %293, %292 : vector<2x32xf32>
    %295 = arith.divf %293, %294 : vector<2x32xf32>
    %296 = vector.extract_strided_slice %284 {offsets = [0, 32], sizes = [2, 32], strides = [1, 1]} : vector<2x128xf32> to vector<2x32xf32>
    %297 = arith.negf %296 : vector<2x32xf32>
    %298 = math.exp %297 : vector<2x32xf32>
    %cst_78 = arith.constant 1.000000e+00 : f32
    %299 = vector.broadcast %cst_78 : f32 to vector<2x32xf32>
    %300 = arith.addf %299, %298 : vector<2x32xf32>
    %301 = arith.divf %299, %300 : vector<2x32xf32>
    %302 = vector.extract_strided_slice %284 {offsets = [0, 64], sizes = [2, 32], strides = [1, 1]} : vector<2x128xf32> to vector<2x32xf32>
    %303 = math.tanh %302 : vector<2x32xf32>
    %304 = vector.extract_strided_slice %284 {offsets = [0, 96], sizes = [2, 32], strides = [1, 1]} : vector<2x128xf32> to vector<2x32xf32>
    %305 = arith.negf %304 : vector<2x32xf32>
    %306 = math.exp %305 : vector<2x32xf32>
    %cst_79 = arith.constant 1.000000e+00 : f32
    %307 = vector.broadcast %cst_79 : f32 to vector<2x32xf32>
    %308 = arith.addf %307, %306 : vector<2x32xf32>
    %309 = arith.divf %307, %308 : vector<2x32xf32>
    %310 = arith.mulf %301, %243 : vector<2x32xf32>
    %311 = arith.mulf %295, %303 : vector<2x32xf32>
    %312 = arith.addf %310, %311 : vector<2x32xf32>
    %313 = math.tanh %312 : vector<2x32xf32>
    %314 = arith.mulf %309, %313 : vector<2x32xf32>
    %315 = vector.extract_strided_slice %289 {offsets = [0, 0], sizes = [2, 32], strides = [1, 1]} : vector<2x128xf32> to vector<2x32xf32>
    %316 = arith.negf %315 : vector<2x32xf32>
    %317 = math.exp %316 : vector<2x32xf32>
    %cst_80 = arith.constant 1.000000e+00 : f32
    %318 = vector.broadcast %cst_80 : f32 to vector<2x32xf32>
    %319 = arith.addf %318, %317 : vector<2x32xf32>
    %320 = arith.divf %318, %319 : vector<2x32xf32>
    %321 = vector.extract_strided_slice %289 {offsets = [0, 32], sizes = [2, 32], strides = [1, 1]} : vector<2x128xf32> to vector<2x32xf32>
    %322 = arith.negf %321 : vector<2x32xf32>
    %323 = math.exp %322 : vector<2x32xf32>
    %cst_81 = arith.constant 1.000000e+00 : f32
    %324 = vector.broadcast %cst_81 : f32 to vector<2x32xf32>
    %325 = arith.addf %324, %323 : vector<2x32xf32>
    %326 = arith.divf %324, %325 : vector<2x32xf32>
    %327 = vector.extract_strided_slice %289 {offsets = [0, 64], sizes = [2, 32], strides = [1, 1]} : vector<2x128xf32> to vector<2x32xf32>
    %328 = math.tanh %327 : vector<2x32xf32>
    %329 = vector.extract_strided_slice %289 {offsets = [0, 96], sizes = [2, 32], strides = [1, 1]} : vector<2x128xf32> to vector<2x32xf32>
    %330 = arith.negf %329 : vector<2x32xf32>
    %331 = math.exp %330 : vector<2x32xf32>
    %cst_82 = arith.constant 1.000000e+00 : f32
    %332 = vector.broadcast %cst_82 : f32 to vector<2x32xf32>
    %333 = arith.addf %332, %331 : vector<2x32xf32>
    %334 = arith.divf %332, %333 : vector<2x32xf32>
    %335 = arith.mulf %326, %268 : vector<2x32xf32>
    %336 = arith.mulf %320, %328 : vector<2x32xf32>
    %337 = arith.addf %335, %336 : vector<2x32xf32>
    %338 = math.tanh %337 : vector<2x32xf32>
    %339 = arith.mulf %334, %338 : vector<2x32xf32>
    %340 = arith.index_cast %c4_i32 : i32 to index
    %c0_83 = arith.constant 0 : index
    %c0_84 = arith.constant 0 : index
    %341 = vector.load %arg9[%340, %c0_83, %c0_84] : memref<8x2x32xf32, #tpu.memory_space<vmem>>, vector<1x2x32xf32>
    %342 = vector.shape_cast %341 : vector<1x2x32xf32> to vector<2x32xf32>
    %343 = vector.shape_cast %314 : vector<2x32xf32> to vector<1x2x32xf32>
    tpu.vector_store %arg9[%340, %c0_83, %c0_84], %343 {strides = array<i32>} : memref<8x2x32xf32, #tpu.memory_space<vmem>>, vector<1x2x32xf32>,
    %344 = arith.index_cast %279 : i32 to index
    %c0_85 = arith.constant 0 : index
    %c0_86 = arith.constant 0 : index
    %345 = vector.load %arg10[%344, %c0_85, %c0_86] : memref<8x2x32xf32, #tpu.memory_space<vmem>>, vector<1x2x32xf32>
    %346 = vector.shape_cast %345 : vector<1x2x32xf32> to vector<2x32xf32>
    %347 = vector.shape_cast %339 : vector<2x32xf32> to vector<1x2x32xf32>
    tpu.vector_store %arg10[%344, %c0_85, %c0_86], %347 {strides = array<i32>} : memref<8x2x32xf32, #tpu.memory_space<vmem>>, vector<1x2x32xf32>,
    %c5_i32 = arith.constant 5 : i32
    %c7_i32_87 = arith.constant 7 : i32
    %348 = arith.subi %c7_i32_87, %c5_i32 : i32
    %349 = arith.index_cast %c5_i32 : i32 to index
    %c0_88 = arith.constant 0 : index
    %c0_89 = arith.constant 0 : index
    %350 = vector.load %arg1[%349, %c0_88, %c0_89] : memref<8x2x128xf32, #tpu.memory_space<vmem>>, vector<1x2x128xf32>
    %351 = vector.shape_cast %350 : vector<1x2x128xf32> to vector<2x128xf32>
    %cst_90 = arith.constant dense<0.000000e+00> : vector<2x128xf32>
    %352 = tpu.matmul %314, %0, %cst_90 {dimension_numbers = #tpu.dot_dimension_numbers<[1], [0], [0], [1], [0, 0, 1, 1], [], []>} : vector<2x32xf32>, vector<32x128xf32>, vector<2x128xf32> -> vector<2x128xf32>
    %353 = arith.addf %351, %352 : vector<2x128xf32>
    %354 = arith.index_cast %348 : i32 to index
    %c0_91 = arith.constant 0 : index
    %c0_92 = arith.constant 0 : index
    %355 = vector.load %arg2[%354, %c0_91, %c0_92] : memref<8x2x128xf32, #tpu.memory_space<vmem>>, vector<1x2x128xf32>
    %356 = vector.shape_cast %355 : vector<1x2x128xf32> to vector<2x128xf32>
    %cst_93 = arith.constant dense<0.000000e+00> : vector<2x128xf32>
    %357 = tpu.matmul %339, %1, %cst_93 {dimension_numbers = #tpu.dot_dimension_numbers<[1], [0], [0], [1], [0, 0, 1, 1], [], []>} : vector<2x32xf32>, vector<32x128xf32>, vector<2x128xf32> -> vector<2x128xf32>
    %358 = arith.addf %356, %357 : vector<2x128xf32>
    %359 = vector.extract_strided_slice %353 {offsets = [0, 0], sizes = [2, 32], strides = [1, 1]} : vector<2x128xf32> to vector<2x32xf32>
    %360 = arith.negf %359 : vector<2x32xf32>
    %361 = math.exp %360 : vector<2x32xf32>
    %cst_94 = arith.constant 1.000000e+00 : f32
    %362 = vector.broadcast %cst_94 : f32 to vector<2x32xf32>
    %363 = arith.addf %362, %361 : vector<2x32xf32>
    %364 = arith.divf %362, %363 : vector<2x32xf32>
    %365 = vector.extract_strided_slice %353 {offsets = [0, 32], sizes = [2, 32], strides = [1, 1]} : vector<2x128xf32> to vector<2x32xf32>
    %366 = arith.negf %365 : vector<2x32xf32>
    %367 = math.exp %366 : vector<2x32xf32>
    %cst_95 = arith.constant 1.000000e+00 : f32
    %368 = vector.broadcast %cst_95 : f32 to vector<2x32xf32>
    %369 = arith.addf %368, %367 : vector<2x32xf32>
    %370 = arith.divf %368, %369 : vector<2x32xf32>
    %371 = vector.extract_strided_slice %353 {offsets = [0, 64], sizes = [2, 32], strides = [1, 1]} : vector<2x128xf32> to vector<2x32xf32>
    %372 = math.tanh %371 : vector<2x32xf32>
    %373 = vector.extract_strided_slice %353 {offsets = [0, 96], sizes = [2, 32], strides = [1, 1]} : vector<2x128xf32> to vector<2x32xf32>
    %374 = arith.negf %373 : vector<2x32xf32>
    %375 = math.exp %374 : vector<2x32xf32>
    %cst_96 = arith.constant 1.000000e+00 : f32
    %376 = vector.broadcast %cst_96 : f32 to vector<2x32xf32>
    %377 = arith.addf %376, %375 : vector<2x32xf32>
    %378 = arith.divf %376, %377 : vector<2x32xf32>
    %379 = arith.mulf %370, %312 : vector<2x32xf32>
    %380 = arith.mulf %364, %372 : vector<2x32xf32>
    %381 = arith.addf %379, %380 : vector<2x32xf32>
    %382 = math.tanh %381 : vector<2x32xf32>
    %383 = arith.mulf %378, %382 : vector<2x32xf32>
    %384 = vector.extract_strided_slice %358 {offsets = [0, 0], sizes = [2, 32], strides = [1, 1]} : vector<2x128xf32> to vector<2x32xf32>
    %385 = arith.negf %384 : vector<2x32xf32>
    %386 = math.exp %385 : vector<2x32xf32>
    %cst_97 = arith.constant 1.000000e+00 : f32
    %387 = vector.broadcast %cst_97 : f32 to vector<2x32xf32>
    %388 = arith.addf %387, %386 : vector<2x32xf32>
    %389 = arith.divf %387, %388 : vector<2x32xf32>
    %390 = vector.extract_strided_slice %358 {offsets = [0, 32], sizes = [2, 32], strides = [1, 1]} : vector<2x128xf32> to vector<2x32xf32>
    %391 = arith.negf %390 : vector<2x32xf32>
    %392 = math.exp %391 : vector<2x32xf32>
    %cst_98 = arith.constant 1.000000e+00 : f32
    %393 = vector.broadcast %cst_98 : f32 to vector<2x32xf32>
    %394 = arith.addf %393, %392 : vector<2x32xf32>
    %395 = arith.divf %393, %394 : vector<2x32xf32>
    %396 = vector.extract_strided_slice %358 {offsets = [0, 64], sizes = [2, 32], strides = [1, 1]} : vector<2x128xf32> to vector<2x32xf32>
    %397 = math.tanh %396 : vector<2x32xf32>
    %398 = vector.extract_strided_slice %358 {offsets = [0, 96], sizes = [2, 32], strides = [1, 1]} : vector<2x128xf32> to vector<2x32xf32>
    %399 = arith.negf %398 : vector<2x32xf32>
    %400 = math.exp %399 : vector<2x32xf32>
    %cst_99 = arith.constant 1.000000e+00 : f32
    %401 = vector.broadcast %cst_99 : f32 to vector<2x32xf32>
    %402 = arith.addf %401, %400 : vector<2x32xf32>
    %403 = arith.divf %401, %402 : vector<2x32xf32>
    %404 = arith.mulf %395, %337 : vector<2x32xf32>
    %405 = arith.mulf %389, %397 : vector<2x32xf32>
    %406 = arith.addf %404, %405 : vector<2x32xf32>
    %407 = math.tanh %406 : vector<2x32xf32>
    %408 = arith.mulf %403, %407 : vector<2x32xf32>
    %409 = arith.index_cast %c5_i32 : i32 to index
    %c0_100 = arith.constant 0 : index
    %c0_101 = arith.constant 0 : index
    %410 = vector.load %arg9[%409, %c0_100, %c0_101] : memref<8x2x32xf32, #tpu.memory_space<vmem>>, vector<1x2x32xf32>
    %411 = vector.shape_cast %410 : vector<1x2x32xf32> to vector<2x32xf32>
    %412 = vector.shape_cast %383 : vector<2x32xf32> to vector<1x2x32xf32>
    tpu.vector_store %arg9[%409, %c0_100, %c0_101], %412 {strides = array<i32>} : memref<8x2x32xf32, #tpu.memory_space<vmem>>, vector<1x2x32xf32>,
    %413 = arith.index_cast %348 : i32 to index
    %c0_102 = arith.constant 0 : index
    %c0_103 = arith.constant 0 : index
    %414 = vector.load %arg10[%413, %c0_102, %c0_103] : memref<8x2x32xf32, #tpu.memory_space<vmem>>, vector<1x2x32xf32>
    %415 = vector.shape_cast %414 : vector<1x2x32xf32> to vector<2x32xf32>
    %416 = vector.shape_cast %408 : vector<2x32xf32> to vector<1x2x32xf32>
    tpu.vector_store %arg10[%413, %c0_102, %c0_103], %416 {strides = array<i32>} : memref<8x2x32xf32, #tpu.memory_space<vmem>>, vector<1x2x32xf32>,
    %c6_i32 = arith.constant 6 : i32
    %c7_i32_104 = arith.constant 7 : i32
    %417 = arith.subi %c7_i32_104, %c6_i32 : i32
    %418 = arith.index_cast %c6_i32 : i32 to index
    %c0_105 = arith.constant 0 : index
    %c0_106 = arith.constant 0 : index
    %419 = vector.load %arg1[%418, %c0_105, %c0_106] : memref<8x2x128xf32, #tpu.memory_space<vmem>>, vector<1x2x128xf32>
    %420 = vector.shape_cast %419 : vector<1x2x128xf32> to vector<2x128xf32>
    %cst_107 = arith.constant dense<0.000000e+00> : vector<2x128xf32>
    %421 = tpu.matmul %383, %0, %cst_107 {dimension_numbers = #tpu.dot_dimension_numbers<[1], [0], [0], [1], [0, 0, 1, 1], [], []>} : vector<2x32xf32>, vector<32x128xf32>, vector<2x128xf32> -> vector<2x128xf32>
    %422 = arith.addf %420, %421 : vector<2x128xf32>
    %423 = arith.index_cast %417 : i32 to index
    %c0_108 = arith.constant 0 : index
    %c0_109 = arith.constant 0 : index
    %424 = vector.load %arg2[%423, %c0_108, %c0_109] : memref<8x2x128xf32, #tpu.memory_space<vmem>>, vector<1x2x128xf32>
    %425 = vector.shape_cast %424 : vector<1x2x128xf32> to vector<2x128xf32>
    %cst_110 = arith.constant dense<0.000000e+00> : vector<2x128xf32>
    %426 = tpu.matmul %408, %1, %cst_110 {dimension_numbers = #tpu.dot_dimension_numbers<[1], [0], [0], [1], [0, 0, 1, 1], [], []>} : vector<2x32xf32>, vector<32x128xf32>, vector<2x128xf32> -> vector<2x128xf32>
    %427 = arith.addf %425, %426 : vector<2x128xf32>
    %428 = vector.extract_strided_slice %422 {offsets = [0, 0], sizes = [2, 32], strides = [1, 1]} : vector<2x128xf32> to vector<2x32xf32>
    %429 = arith.negf %428 : vector<2x32xf32>
    %430 = math.exp %429 : vector<2x32xf32>
    %cst_111 = arith.constant 1.000000e+00 : f32
    %431 = vector.broadcast %cst_111 : f32 to vector<2x32xf32>
    %432 = arith.addf %431, %430 : vector<2x32xf32>
    %433 = arith.divf %431, %432 : vector<2x32xf32>
    %434 = vector.extract_strided_slice %422 {offsets = [0, 32], sizes = [2, 32], strides = [1, 1]} : vector<2x128xf32> to vector<2x32xf32>
    %435 = arith.negf %434 : vector<2x32xf32>
    %436 = math.exp %435 : vector<2x32xf32>
    %cst_112 = arith.constant 1.000000e+00 : f32
    %437 = vector.broadcast %cst_112 : f32 to vector<2x32xf32>
    %438 = arith.addf %437, %436 : vector<2x32xf32>
    %439 = arith.divf %437, %438 : vector<2x32xf32>
    %440 = vector.extract_strided_slice %422 {offsets = [0, 64], sizes = [2, 32], strides = [1, 1]} : vector<2x128xf32> to vector<2x32xf32>
    %441 = math.tanh %440 : vector<2x32xf32>
    %442 = vector.extract_strided_slice %422 {offsets = [0, 96], sizes = [2, 32], strides = [1, 1]} : vector<2x128xf32> to vector<2x32xf32>
    %443 = arith.negf %442 : vector<2x32xf32>
    %444 = math.exp %443 : vector<2x32xf32>
    %cst_113 = arith.constant 1.000000e+00 : f32
    %445 = vector.broadcast %cst_113 : f32 to vector<2x32xf32>
    %446 = arith.addf %445, %444 : vector<2x32xf32>
    %447 = arith.divf %445, %446 : vector<2x32xf32>
    %448 = arith.mulf %439, %381 : vector<2x32xf32>
    %449 = arith.mulf %433, %441 : vector<2x32xf32>
    %450 = arith.addf %448, %449 : vector<2x32xf32>
    %451 = math.tanh %450 : vector<2x32xf32>
    %452 = arith.mulf %447, %451 : vector<2x32xf32>
    %453 = vector.extract_strided_slice %427 {offsets = [0, 0], sizes = [2, 32], strides = [1, 1]} : vector<2x128xf32> to vector<2x32xf32>
    %454 = arith.negf %453 : vector<2x32xf32>
    %455 = math.exp %454 : vector<2x32xf32>
    %cst_114 = arith.constant 1.000000e+00 : f32
    %456 = vector.broadcast %cst_114 : f32 to vector<2x32xf32>
    %457 = arith.addf %456, %455 : vector<2x32xf32>
    %458 = arith.divf %456, %457 : vector<2x32xf32>
    %459 = vector.extract_strided_slice %427 {offsets = [0, 32], sizes = [2, 32], strides = [1, 1]} : vector<2x128xf32> to vector<2x32xf32>
    %460 = arith.negf %459 : vector<2x32xf32>
    %461 = math.exp %460 : vector<2x32xf32>
    %cst_115 = arith.constant 1.000000e+00 : f32
    %462 = vector.broadcast %cst_115 : f32 to vector<2x32xf32>
    %463 = arith.addf %462, %461 : vector<2x32xf32>
    %464 = arith.divf %462, %463 : vector<2x32xf32>
    %465 = vector.extract_strided_slice %427 {offsets = [0, 64], sizes = [2, 32], strides = [1, 1]} : vector<2x128xf32> to vector<2x32xf32>
    %466 = math.tanh %465 : vector<2x32xf32>
    %467 = vector.extract_strided_slice %427 {offsets = [0, 96], sizes = [2, 32], strides = [1, 1]} : vector<2x128xf32> to vector<2x32xf32>
    %468 = arith.negf %467 : vector<2x32xf32>
    %469 = math.exp %468 : vector<2x32xf32>
    %cst_116 = arith.constant 1.000000e+00 : f32
    %470 = vector.broadcast %cst_116 : f32 to vector<2x32xf32>
    %471 = arith.addf %470, %469 : vector<2x32xf32>
    %472 = arith.divf %470, %471 : vector<2x32xf32>
    %473 = arith.mulf %464, %406 : vector<2x32xf32>
    %474 = arith.mulf %458, %466 : vector<2x32xf32>
    %475 = arith.addf %473, %474 : vector<2x32xf32>
    %476 = math.tanh %475 : vector<2x32xf32>
    %477 = arith.mulf %472, %476 : vector<2x32xf32>
    %478 = arith.index_cast %c6_i32 : i32 to index
    %c0_117 = arith.constant 0 : index
    %c0_118 = arith.constant 0 : index
    %479 = vector.load %arg9[%478, %c0_117, %c0_118] : memref<8x2x32xf32, #tpu.memory_space<vmem>>, vector<1x2x32xf32>
    %480 = vector.shape_cast %479 : vector<1x2x32xf32> to vector<2x32xf32>
    %481 = vector.shape_cast %452 : vector<2x32xf32> to vector<1x2x32xf32>
    tpu.vector_store %arg9[%478, %c0_117, %c0_118], %481 {strides = array<i32>} : memref<8x2x32xf32, #tpu.memory_space<vmem>>, vector<1x2x32xf32>,
    %482 = arith.index_cast %417 : i32 to index
    %c0_119 = arith.constant 0 : index
    %c0_120 = arith.constant 0 : index
    %483 = vector.load %arg10[%482, %c0_119, %c0_120] : memref<8x2x32xf32, #tpu.memory_space<vmem>>, vector<1x2x32xf32>
    %484 = vector.shape_cast %483 : vector<1x2x32xf32> to vector<2x32xf32>
    %485 = vector.shape_cast %477 : vector<2x32xf32> to vector<1x2x32xf32>
    tpu.vector_store %arg10[%482, %c0_119, %c0_120], %485 {strides = array<i32>} : memref<8x2x32xf32, #tpu.memory_space<vmem>>, vector<1x2x32xf32>,
    %c7_i32_121 = arith.constant 7 : i32
    %c7_i32_122 = arith.constant 7 : i32
    %486 = arith.subi %c7_i32_122, %c7_i32_121 : i32
    %487 = arith.index_cast %c7_i32_121 : i32 to index
    %c0_123 = arith.constant 0 : index
    %c0_124 = arith.constant 0 : index
    %488 = vector.load %arg1[%487, %c0_123, %c0_124] : memref<8x2x128xf32, #tpu.memory_space<vmem>>, vector<1x2x128xf32>
    %489 = vector.shape_cast %488 : vector<1x2x128xf32> to vector<2x128xf32>
    %cst_125 = arith.constant dense<0.000000e+00> : vector<2x128xf32>
    %490 = tpu.matmul %452, %0, %cst_125 {dimension_numbers = #tpu.dot_dimension_numbers<[1], [0], [0], [1], [0, 0, 1, 1], [], []>} : vector<2x32xf32>, vector<32x128xf32>, vector<2x128xf32> -> vector<2x128xf32>
    %491 = arith.addf %489, %490 : vector<2x128xf32>
    %492 = arith.index_cast %486 : i32 to index
    %c0_126 = arith.constant 0 : index
    %c0_127 = arith.constant 0 : index
    %493 = vector.load %arg2[%492, %c0_126, %c0_127] : memref<8x2x128xf32, #tpu.memory_space<vmem>>, vector<1x2x128xf32>
    %494 = vector.shape_cast %493 : vector<1x2x128xf32> to vector<2x128xf32>
    %cst_128 = arith.constant dense<0.000000e+00> : vector<2x128xf32>
    %495 = tpu.matmul %477, %1, %cst_128 {dimension_numbers = #tpu.dot_dimension_numbers<[1], [0], [0], [1], [0, 0, 1, 1], [], []>} : vector<2x32xf32>, vector<32x128xf32>, vector<2x128xf32> -> vector<2x128xf32>
    %496 = arith.addf %494, %495 : vector<2x128xf32>
    %497 = vector.extract_strided_slice %491 {offsets = [0, 0], sizes = [2, 32], strides = [1, 1]} : vector<2x128xf32> to vector<2x32xf32>
    %498 = arith.negf %497 : vector<2x32xf32>
    %499 = math.exp %498 : vector<2x32xf32>
    %cst_129 = arith.constant 1.000000e+00 : f32
    %500 = vector.broadcast %cst_129 : f32 to vector<2x32xf32>
    %501 = arith.addf %500, %499 : vector<2x32xf32>
    %502 = arith.divf %500, %501 : vector<2x32xf32>
    %503 = vector.extract_strided_slice %491 {offsets = [0, 32], sizes = [2, 32], strides = [1, 1]} : vector<2x128xf32> to vector<2x32xf32>
    %504 = arith.negf %503 : vector<2x32xf32>
    %505 = math.exp %504 : vector<2x32xf32>
    %cst_130 = arith.constant 1.000000e+00 : f32
    %506 = vector.broadcast %cst_130 : f32 to vector<2x32xf32>
    %507 = arith.addf %506, %505 : vector<2x32xf32>
    %508 = arith.divf %506, %507 : vector<2x32xf32>
    %509 = vector.extract_strided_slice %491 {offsets = [0, 64], sizes = [2, 32], strides = [1, 1]} : vector<2x128xf32> to vector<2x32xf32>
    %510 = math.tanh %509 : vector<2x32xf32>
    %511 = vector.extract_strided_slice %491 {offsets = [0, 96], sizes = [2, 32], strides = [1, 1]} : vector<2x128xf32> to vector<2x32xf32>
    %512 = arith.negf %511 : vector<2x32xf32>
    %513 = math.exp %512 : vector<2x32xf32>
    %cst_131 = arith.constant 1.000000e+00 : f32
    %514 = vector.broadcast %cst_131 : f32 to vector<2x32xf32>
    %515 = arith.addf %514, %513 : vector<2x32xf32>
    %516 = arith.divf %514, %515 : vector<2x32xf32>
    %517 = arith.mulf %508, %450 : vector<2x32xf32>
    %518 = arith.mulf %502, %510 : vector<2x32xf32>
    %519 = arith.addf %517, %518 : vector<2x32xf32>
    %520 = math.tanh %519 : vector<2x32xf32>
    %521 = arith.mulf %516, %520 : vector<2x32xf32>
    %522 = vector.extract_strided_slice %496 {offsets = [0, 0], sizes = [2, 32], strides = [1, 1]} : vector<2x128xf32> to vector<2x32xf32>
    %523 = arith.negf %522 : vector<2x32xf32>
    %524 = math.exp %523 : vector<2x32xf32>
    %cst_132 = arith.constant 1.000000e+00 : f32
    %525 = vector.broadcast %cst_132 : f32 to vector<2x32xf32>
    %526 = arith.addf %525, %524 : vector<2x32xf32>
    %527 = arith.divf %525, %526 : vector<2x32xf32>
    %528 = vector.extract_strided_slice %496 {offsets = [0, 32], sizes = [2, 32], strides = [1, 1]} : vector<2x128xf32> to vector<2x32xf32>
    %529 = arith.negf %528 : vector<2x32xf32>
    %530 = math.exp %529 : vector<2x32xf32>
    %cst_133 = arith.constant 1.000000e+00 : f32
    %531 = vector.broadcast %cst_133 : f32 to vector<2x32xf32>
    %532 = arith.addf %531, %530 : vector<2x32xf32>
    %533 = arith.divf %531, %532 : vector<2x32xf32>
    %534 = vector.extract_strided_slice %496 {offsets = [0, 64], sizes = [2, 32], strides = [1, 1]} : vector<2x128xf32> to vector<2x32xf32>
    %535 = math.tanh %534 : vector<2x32xf32>
    %536 = vector.extract_strided_slice %496 {offsets = [0, 96], sizes = [2, 32], strides = [1, 1]} : vector<2x128xf32> to vector<2x32xf32>
    %537 = arith.negf %536 : vector<2x32xf32>
    %538 = math.exp %537 : vector<2x32xf32>
    %cst_134 = arith.constant 1.000000e+00 : f32
    %539 = vector.broadcast %cst_134 : f32 to vector<2x32xf32>
    %540 = arith.addf %539, %538 : vector<2x32xf32>
    %541 = arith.divf %539, %540 : vector<2x32xf32>
    %542 = arith.mulf %533, %475 : vector<2x32xf32>
    %543 = arith.mulf %527, %535 : vector<2x32xf32>
    %544 = arith.addf %542, %543 : vector<2x32xf32>
    %545 = math.tanh %544 : vector<2x32xf32>
    %546 = arith.mulf %541, %545 : vector<2x32xf32>
    %547 = arith.index_cast %c7_i32_121 : i32 to index
    %c0_135 = arith.constant 0 : index
    %c0_136 = arith.constant 0 : index
    %548 = vector.load %arg9[%547, %c0_135, %c0_136] : memref<8x2x32xf32, #tpu.memory_space<vmem>>, vector<1x2x32xf32>
    %549 = vector.shape_cast %548 : vector<1x2x32xf32> to vector<2x32xf32>
    %550 = vector.shape_cast %521 : vector<2x32xf32> to vector<1x2x32xf32>
    tpu.vector_store %arg9[%547, %c0_135, %c0_136], %550 {strides = array<i32>} : memref<8x2x32xf32, #tpu.memory_space<vmem>>, vector<1x2x32xf32>,
    %551 = arith.index_cast %486 : i32 to index
    %c0_137 = arith.constant 0 : index
    %c0_138 = arith.constant 0 : index
    %552 = vector.load %arg10[%551, %c0_137, %c0_138] : memref<8x2x32xf32, #tpu.memory_space<vmem>>, vector<1x2x32xf32>
    %553 = vector.shape_cast %552 : vector<1x2x32xf32> to vector<2x32xf32>
    %554 = vector.shape_cast %546 : vector<2x32xf32> to vector<1x2x32xf32>
    tpu.vector_store %arg10[%551, %c0_137, %c0_138], %554 {strides = array<i32>} : memref<8x2x32xf32, #tpu.memory_space<vmem>>, vector<1x2x32xf32>,
    %c8_i32 = arith.constant 8 : i32
    %c0_139 = arith.constant 0 : index
    %c0_140 = arith.constant 0 : index
    %c0_141 = arith.constant 0 : index
    %555 = vector.load %arg9[%c0_139, %c0_140, %c0_141] : memref<8x2x32xf32, #tpu.memory_space<vmem>>, vector<8x2x32xf32>
    %556 = vector.shape_cast %555 : vector<8x2x32xf32> to vector<16x32xf32>
    %c0_142 = arith.constant 0 : index
    %c0_143 = arith.constant 0 : index
    %c0_144 = arith.constant 0 : index
    %557 = vector.load %arg10[%c0_142, %c0_143, %c0_144] : memref<8x2x32xf32, #tpu.memory_space<vmem>>, vector<8x2x32xf32>
    %558 = vector.shape_cast %557 : vector<8x2x32xf32> to vector<16x32xf32>
    %c0_145 = arith.constant 0 : index
    %c0_146 = arith.constant 0 : index
    %559 = vector.load %arg5[%c0_145, %c0_146] : memref<32x4xf32, #tpu.memory_space<vmem>>, vector<32x4xf32>
    %cst_147 = arith.constant dense<0.000000e+00> : vector<16x4xf32>
    %560 = tpu.matmul %556, %559, %cst_147 {dimension_numbers = #tpu.dot_dimension_numbers<[1], [0], [0], [1], [0, 0, 1, 1], [], []>} : vector<16x32xf32>, vector<32x4xf32>, vector<16x4xf32> -> vector<16x4xf32>
    %c0_148 = arith.constant 0 : index
    %c0_149 = arith.constant 0 : index
    %561 = vector.load %arg6[%c0_148, %c0_149] : memref<32x4xf32, #tpu.memory_space<vmem>>, vector<32x4xf32>
    %cst_150 = arith.constant dense<0.000000e+00> : vector<16x4xf32>
    %562 = tpu.matmul %558, %561, %cst_150 {dimension_numbers = #tpu.dot_dimension_numbers<[1], [0], [0], [1], [0, 0, 1, 1], [], []>} : vector<16x32xf32>, vector<32x4xf32>, vector<16x4xf32> -> vector<16x4xf32>
    %563 = arith.addf %560, %562 : vector<16x4xf32>
    %c0_151 = arith.constant 0 : index
    %c0_152 = arith.constant 0 : index
    %564 = vector.load %arg7[%c0_151, %c0_152] : memref<1x4xf32, #tpu.memory_space<vmem>>, vector<1x4xf32>
    %565 = vector.broadcast %564 : vector<1x4xf32> to vector<16x4xf32>
    %566 = arith.addf %563, %565 : vector<16x4xf32>
    %567 = vector.shape_cast %566 : vector<16x4xf32> to vector<8x2x4xf32>
    %c0_153 = arith.constant 0 : index
    %c0_154 = arith.constant 0 : index
    %c0_155 = arith.constant 0 : index
    %568 = vector.load %arg8[%c0_153, %c0_154, %c0_155] : memref<8x2x4xf32, #tpu.memory_space<vmem>>, vector<8x2x4xf32>
    tpu.vector_store %arg8[%c0_153, %c0_154, %c0_155], %567 {strides = array<i32>} : memref<8x2x4xf32, #tpu.memory_space<vmem>>, vector<8x2x4xf32>,
    return
  }
  func.func @transform_0(%arg0: i32) -> (i32, i32, i32) {
    %c0_i32 = arith.constant 0 : i32
    %c0_i32_0 = arith.constant 0 : i32
    %c0_i32_1 = arith.constant 0 : i32
    %c0_i32_2 = arith.constant 0 : i32
    return %c0_i32, %c0_i32_0, %c0_i32_1 : i32, i32, i32
  }
  func.func @transform_1(%arg0: i32) -> (i32, i32, i32) {
    %c0_i32 = arith.constant 0 : i32
    %c0_i32_0 = arith.constant 0 : i32
    %c0_i32_1 = arith.constant 0 : i32
    %c0_i32_2 = arith.constant 0 : i32
    return %c0_i32, %c0_i32_0, %c0_i32_1 : i32, i32, i32
  }
  func.func @transform_2(%arg0: i32) -> (i32, i32) {
    %c0_i32 = arith.constant 0 : i32
    %c0_i32_0 = arith.constant 0 : i32
    %c0_i32_1 = arith.constant 0 : i32
    return %c0_i32, %c0_i32_0 : i32, i32
  }
  func.func @transform_3(%arg0: i32) -> (i32, i32) {
    %c0_i32 = arith.constant 0 : i32
    %c0_i32_0 = arith.constant 0 : i32
    %c0_i32_1 = arith.constant 0 : i32
    return %c0_i32, %c0_i32_0 : i32, i32
  }
  func.func @transform_4(%arg0: i32) -> (i32, i32) {
    %c0_i32 = arith.constant 0 : i32
    %c0_i32_0 = arith.constant 0 : i32
    %c0_i32_1 = arith.constant 0 : i32
    return %c0_i32, %c0_i32_0 : i32, i32
  }
  func.func @transform_5(%arg0: i32) -> (i32, i32) {
    %c0_i32 = arith.constant 0 : i32
    %c0_i32_0 = arith.constant 0 : i32
    %c0_i32_1 = arith.constant 0 : i32
    return %c0_i32, %c0_i32_0 : i32, i32
  }
  func.func @transform_6(%arg0: i32) -> (i32, i32) {
    %c0_i32 = arith.constant 0 : i32
    %c0_i32_0 = arith.constant 0 : i32
    %c0_i32_1 = arith.constant 0 : i32
    return %c0_i32, %c0_i32_0 : i32, i32
  }
  func.func @transform_7(%arg0: i32) -> (i32, i32, i32) {
    %c0_i32 = arith.constant 0 : i32
    %c0_i32_0 = arith.constant 0 : i32
    %c0_i32_1 = arith.constant 0 : i32
    %c0_i32_2 = arith.constant 0 : i32
    return %c0_i32, %c0_i32_0, %c0_i32_1 : i32, i32, i32
  }
}

</mosaic_0001>

<llo_original>
// kernel: tpu_custom_call.1
$region0: #{tpu_custom_call.1}
  #allocation0 [shape = 'u32[]', space=smem, size = 0x4, offset = 0x4, fixed_abs, tag = 'smem constant byte address 0x4 - core index']
  #allocation1 [shape = 'u32[72,128]{1,0:T(1,128)}', space=vmem, size = 0x9000, scoped, tag = 'internal scratch']
  #allocation2 [shape = 'f32[8,2,32]{2,1,0:T(2,128)}', space=vmem, size = 0x2000, scoped, tag = 'scratch operand']
  #allocation3 [shape = 'f32[8,2,32]{2,1,0:T(2,128)}', space=vmem, size = 0x2000, scoped, tag = 'scratch operand']
  %s0 = inlined_call_operand.hbm [shape: f32[8,2,128], index: 0, kind: input, shape index: {}]
  %s1 = inlined_call_operand.hbm [shape: f32[8,2,128], index: 1, kind: input, shape index: {}]
  %s2 = inlined_call_operand.vmem [shape: f32[32,128], index: 2, kind: input, shape index: {}]
  %s3 = inlined_call_operand.vmem [shape: f32[32,128], index: 3, kind: input, shape index: {}]
  %s4 = inlined_call_operand.vmem [shape: f32[32,4], index: 4, kind: input, shape index: {}]
  %s5 = inlined_call_operand.vmem [shape: f32[32,4], index: 5, kind: input, shape index: {}]
  %s6 = inlined_call_operand.vmem [shape: f32[1,4], index: 6, kind: input, shape index: {}]
  %s7 = inlined_call_operand.vmem [shape: f32[8,2,4], index: 7, kind: output, shape index: {}]
  %s8 = sld [smem:[#allocation0]]
  $region46: #{tpu_custom_call.1} parent=0
    _
  %s10 = ssub.s32 1, %s8
  %s11 = scalar_select 0, %s10, %s8
  $region1: #{tpu_custom_call.1} parent=0
    #allocation4 [shape = 'u8[8192]{0}', space=vmem, size = 0x2000, scoped, tag = 'input window, operand 0, single buffered']
    #allocation5 [shape = 's32[1]{0}', space=sflag, size = 0x4, scoped, tag = 'scoped memory for tpu_custom_call.1']
    #allocation6 [shape = 'u8[8192]{0}', space=vmem, size = 0x2000, scoped, tag = 'input window, operand 1, single buffered']
    #allocation7 [shape = 's32[1]{0}', space=sflag, size = 0x4, scoped, tag = 'scoped memory for tpu_custom_call.1']
    %12 = vsyncpa [#allocation5], 0
    %13 = vsyncpa [#allocation7], 0
    // Predicated region
    $region2: #{tpu_custom_call.1} parent=1 // pred_check
      _
    $region3: #{tpu_custom_call.1} parent=1 // pred_check_branch
      %15 = sbr.rel (0) target = $region5
    $region4: #{tpu_custom_call.1} parent=1 // pred_region
      %17 = vsyncadd [#allocation5], 0
      %s18 = sshll.u32 %s0, 4
      %s19 = int_to_ptr.hbm [resolvable:$true] %s18
      %s20 = sshll.u32 [#allocation4], 4
      %s21 = int_to_ptr.vmem [resolvable:$true] %s20
      %26 = dma.hbm_to_vmem [thread:$0]  %s19, 256, %s21, [#allocation5], 32, 32, 2
    $region5: #{tpu_custom_call.1} parent=1 // pred_fallthru
      _
    // Predicated region
    $region6: #{tpu_custom_call.1} parent=1 // pred_check
      _
    $region7: #{tpu_custom_call.1} parent=1 // pred_check_branch
      %28 = sbr.rel (0) target = $region9
    $region8: #{tpu_custom_call.1} parent=1 // pred_region
      %30 = vsyncadd [#allocation7], 0
      %s31 = sshll.u32 %s1, 4
      %s32 = int_to_ptr.hbm [resolvable:$true] %s31
      %s33 = sshll.u32 [#allocation6], 4
      %s34 = int_to_ptr.vmem [resolvable:$true] %s33
      %39 = dma.hbm_to_vmem [thread:$0]  %s32, 256, %s34, [#allocation7], 32, 32, 2
    $region9: #{tpu_custom_call.1} parent=1 // pred_fallthru
      _
    // Predicated region
    $region10: #{tpu_custom_call.1} parent=1 // pred_check
      _
    $region11: #{tpu_custom_call.1} parent=1 // pred_check_branch
      %41 = sbr.rel (0) target = $region13
    $region12: #{tpu_custom_call.1} parent=1 // pred_region
      _
    $region13: #{tpu_custom_call.1} parent=1 // pred_fallthru
      _
    // Predicated region
    $region14: #{tpu_custom_call.1} parent=1 // pred_check
      _
    $region15: #{tpu_custom_call.1} parent=1 // pred_check_branch
      %43 = sbr.rel (0) target = $region17
    $region16: #{tpu_custom_call.1} parent=1 // pred_region
      _
    $region17: #{tpu_custom_call.1} parent=1 // pred_fallthru
      _
    // Predicated region
    $region18: #{tpu_custom_call.1} parent=1 // pred_check
      _
    $region19: #{tpu_custom_call.1} parent=1 // pred_check_branch
      %45 = sbr.rel (0) target = $region21
    $region20: #{tpu_custom_call.1} parent=1 // pred_region
      _
    $region21: #{tpu_custom_call.1} parent=1 // pred_fallthru
      _
    // Predicated region
    $region22: #{tpu_custom_call.1} parent=1 // pred_check
      _
    $region23: #{tpu_custom_call.1} parent=1 // pred_check_branch
      %47 = sbr.rel (0) target = $region25
    $region24: #{tpu_custom_call.1} parent=1 // pred_region
      _
    $region25: #{tpu_custom_call.1} parent=1 // pred_fallthru
      _
    // Predicated region
    $region26: #{tpu_custom_call.1} parent=1 // pred_check
      _
    $region27: #{tpu_custom_call.1} parent=1 // pred_check_branch
      %49 = sbr.rel (0) target = $region29
    $region28: #{tpu_custom_call.1} parent=1 // pred_region
      _
    $region29: #{tpu_custom_call.1} parent=1 // pred_fallthru
      _
    // Predicated region
    $region30: #{tpu_custom_call.1} parent=1 // pred_check
      _
    $region31: #{tpu_custom_call.1} parent=1 // pred_check_branch
      %51 = sbr.rel (0) target = $region33
    $region32: #{tpu_custom_call.1} parent=1 // pred_region
      %53 = dma.done [#allocation5], 256
    $region33: #{tpu_custom_call.1} parent=1 // pred_fallthru
      _
    // Predicated region
    $region34: #{tpu_custom_call.1} parent=1 // pred_check
      _
    $region35: #{tpu_custom_call.1} parent=1 // pred_check_branch
      %55 = sbr.rel (0) target = $region37
    $region36: #{tpu_custom_call.1} parent=1 // pred_region
      %57 = dma.done [#allocation7], 256
    $region37: #{tpu_custom_call.1} parent=1 // pred_fallthru
      _
    %v58 = vld [vmem:[%s2] sm:$0xff]
    %v59 = vld [vmem:[%s2 + $0x8] sm:$0xff]
    %v60 = vld [vmem:[%s2 + $0x10] sm:$0xff]
    %v61 = vld [vmem:[%s2 + $0x18] sm:$0xff]
    %v62 = vld [vmem:[%s3] sm:$0xff]
    %v63 = vld [vmem:[%s3 + $0x8] sm:$0xff]
    %v64 = vld [vmem:[%s3 + $0x10] sm:$0xff]
    %v65 = vld [vmem:[%s3 + $0x18] sm:$0xff]
    %v66 = vld [vmem:[#allocation4] sm:$0x3]
    %vm67 = vcmask 261120
    %v69 = vsel %vm67, 0.0, 0
    %71 = vmatpush.msra.mxu0 0.0
    %72 = vmatpush.msra.mxu0 0.0
    %73 = vmatpush.msra.mxu0 0.0
    %74 = vmatpush.msra.mxu0 0.0
    %75 = vmatpush.msra.mxu0 0.0
    %76 = vmatpush.msra.mxu0 0.0
    %77 = vmatpush.msra.mxu0 0.0
    %78 = vmatpush.msra.mxu0 0.0
    %79 = vmatpush.msra.mxu0 0.0
    %80 = vmatpush.msra.mxu0 0.0
    %81 = vmatpush.msra.mxu0 0.0
    %82 = vmatpush.msra.mxu0 0.0
    %83 = vmatpush.msra.mxu0 %v61
    %84 = vmatpush.msra.mxu0 %v60
    %85 = vmatpush.msra.mxu0 %v59
    %86 = vmatpush.msra.mxu0 %v58
    %87 = vmatmul.f32.gmra.mxu0 %v69
    %v88 = vpop.f32.mrf.mxu0
    %v89 = vadd.f32 0.0, %v88
    %90 = vdwg.mxu0
    %v91 = vadd.f32 %v66, %v89
    %s92 = scalar_lea.vmem [#allocation6], 14
    %v93 = vld [vmem:[%s92] sm:$0x3]
    %94 = vmatpush.msra.mxu0 0.0
    %95 = vmatpush.msra.mxu0 0.0
    %96 = vmatpush.msra.mxu0 0.0
    %97 = vmatpush.msra.mxu0 0.0
    %98 = vmatpush.msra.mxu0 0.0
    %99 = vmatpush.msra.mxu0 0.0
    %100 = vmatpush.msra.mxu0 0.0
    %101 = vmatpush.msra.mxu0 0.0
    %102 = vmatpush.msra.mxu0 0.0
    %103 = vmatpush.msra.mxu0 0.0
    %104 = vmatpush.msra.mxu0 0.0
    %105 = vmatpush.msra.mxu0 0.0
    %106 = vmatpush.msra.mxu0 %v65
    %107 = vmatpush.msra.mxu0 %v64
    %108 = vmatpush.msra.mxu0 %v63
    %109 = vmatpush.msra.mxu0 %v62
    %110 = vmatmul.f32.gmra.mxu0 %v69
    %v111 = vpop.f32.mrf.mxu0
    %v112 = vadd.f32 0.0, %v111
    %113 = vdwg.mxu0
    %v114 = vadd.f32 %v93, %v112
    %v115 = vxor.u32 %v91, 2147483648
    %v116 = vmul.f32 %v115, 1.442695
    %v117 = vpow.pop %v116
    %v118 = vadd.f32 %v117, 1.0
    %v119 = vrcp.pop %v118
    %v120 = vmul.f32 %v118, %v119
    %v121 = vsub.f32 1.0, %v120
    %v122 = vmul.f32 %v119, %v121
    %v123 = vadd.f32 %v119, %v122
    %vm124 = vweird.f32 %v118
    %vm125 = vweird.f32 %v119
    %vm126 = vmor %vm124, %vm125
    %v127 = vsel %vm126, %v119, %v123
    %v128 = vand.u32 2147483647, %v118
    %vm129 = vcmp.eq.f32.partialorder %v128, 8.507059e+37
    %v130 = vand.u32 %v118, 2147483648
    %v131 = vor.u32 1.1754944e-38, %v130
    %v132 = vsel %vm129, %v131, %v127
    %v133 = vmul.f32 1.0, %v132
    %v134 = vtanh.pop %v91
    %v135 = vmul.f32 %v133, 0.0
    %137 = vrot.lane.b32.xlu0 %v134, 64
    %v138 = vpop.permute.xlu0 %137
    %v140 = vmul.f32 %v133, %v138
    %142 = vrot.lane.b32.xlu0 %v140, 32
    %v143 = vpop.permute.xlu0 %142
    %v145 = vadd.f32 %v135, %v143
    %v146 = vtanh.pop %v145
    %148 = vrot.lane.b32.xlu0 %v146, 64
    %v149 = vpop.permute.xlu0 %148
    %v151 = vmul.f32 %v133, %v149
    %v152 = vxor.u32 %v114, 2147483648
    %v153 = vmul.f32 %v152, 1.442695
    %v154 = vpow.pop %v153
    %v155 = vadd.f32 %v154, 1.0
    %v156 = vrcp.pop %v155
    %v157 = vmul.f32 %v155, %v156
    %v158 = vsub.f32 1.0, %v157
    %v159 = vmul.f32 %v156, %v158
    %v160 = vadd.f32 %v156, %v159
    %vm161 = vweird.f32 %v155
    %vm162 = vweird.f32 %v156
    %vm163 = vmor %vm161, %vm162
    %v164 = vsel %vm163, %v156, %v160
    %v165 = vand.u32 2147483647, %v155
    %vm166 = vcmp.eq.f32.partialorder %v165, 8.507059e+37
    %v167 = vand.u32 %v155, 2147483648
    %v168 = vor.u32 1.1754944e-38, %v167
    %v169 = vsel %vm166, %v168, %v164
    %v170 = vmul.f32 1.0, %v169
    %v171 = vtanh.pop %v114
    %v172 = vmul.f32 %v170, 0.0
    %174 = vrot.lane.b32.xlu0 %v171, 64
    %v175 = vpop.permute.xlu0 %174
    %v177 = vmul.f32 %v170, %v175
    %179 = vrot.lane.b32.xlu0 %v177, 32
    %v180 = vpop.permute.xlu0 %179
    %v182 = vadd.f32 %v172, %v180
    %v183 = vtanh.pop %v182
    %185 = vrot.lane.b32.xlu0 %v183, 64
    %v186 = vpop.permute.xlu0 %185
    %v188 = vmul.f32 %v170, %v186
    %190 = vrot.lane.b32.xlu0 %v151, 32
    %v191 = vpop.permute.xlu0 %190
    %vm193 = vcmask 254976
    %194 = vst.msk [vmem:[#allocation2] sm:$0x3] %vm193, %v191
    %196 = vrot.lane.b32.xlu0 %v188, 32
    %v197 = vpop.permute.xlu0 %196
    %s199 = scalar_lea.vmem [#allocation3], 14
    %200 = vst.msk [vmem:[%s199] sm:$0x3] %vm193, %v197
    %s201 = scalar_lea.vmem [#allocation4], 2
    %v202 = vld [vmem:[%s201] sm:$0x3]
    %v203 = vsel %vm67, %v191, 0
    %205 = vmatpush.msra.mxu0 0.0
    %206 = vmatpush.msra.mxu0 0.0
    %207 = vmatpush.msra.mxu0 0.0
    %208 = vmatpush.msra.mxu0 0.0
    %209 = vmatpush.msra.mxu0 0.0
    %210 = vmatpush.msra.mxu0 0.0
    %211 = vmatpush.msra.mxu0 0.0
    %212 = vmatpush.msra.mxu0 0.0
    %213 = vmatpush.msra.mxu0 0.0
    %214 = vmatpush.msra.mxu0 0.0
    %215 = vmatpush.msra.mxu0 0.0
    %216 = vmatpush.msra.mxu0 0.0
    %217 = vmatpush.msra.mxu0 %v61
    %218 = vmatpush.msra.mxu0 %v60
    %219 = vmatpush.msra.mxu0 %v59
    %220 = vmatpush.msra.mxu0 %v58
    %221 = vmatmul.f32.gmra.mxu0 %v203
    %v222 = vpop.f32.mrf.mxu0
    %v223 = vadd.f32 0.0, %v222
    %224 = vdwg.mxu0
    %v225 = vadd.f32 %v202, %v223
    %s226 = scalar_lea.vmem [#allocation6], 12
    %v227 = vld [vmem:[%s226] sm:$0x3]
    %v228 = vsel %vm67, %v197, 0
    %230 = vmatpush.msra.mxu0 0.0
    %231 = vmatpush.msra.mxu0 0.0
    %232 = vmatpush.msra.mxu0 0.0
    %233 = vmatpush.msra.mxu0 0.0
    %234 = vmatpush.msra.mxu0 0.0
    %235 = vmatpush.msra.mxu0 0.0
    %236 = vmatpush.msra.mxu0 0.0
    %237 = vmatpush.msra.mxu0 0.0
    %238 = vmatpush.msra.mxu0 0.0
    %239 = vmatpush.msra.mxu0 0.0
    %240 = vmatpush.msra.mxu0 0.0
    %241 = vmatpush.msra.mxu0 0.0
    %242 = vmatpush.msra.mxu0 %v65
    %243 = vmatpush.msra.mxu0 %v64
    %244 = vmatpush.msra.mxu0 %v63
    %245 = vmatpush.msra.mxu0 %v62
    %246 = vmatmul.f32.gmra.mxu0 %v228
    %v247 = vpop.f32.mrf.mxu0
    %v248 = vadd.f32 0.0, %v247
    %249 = vdwg.mxu0
    %v250 = vadd.f32 %v227, %v248
    %v251 = vxor.u32 %v225, 2147483648
    %v252 = vmul.f32 %v251, 1.442695
    %v253 = vpow.pop %v252
    %v254 = vadd.f32 %v253, 1.0
    %v255 = vrcp.pop %v254
    %v256 = vmul.f32 %v254, %v255
    %v257 = vsub.f32 1.0, %v256
    %v258 = vmul.f32 %v255, %v257
    %v259 = vadd.f32 %v255, %v258
    %vm260 = vweird.f32 %v254
    %vm261 = vweird.f32 %v255
    %vm262 = vmor %vm260, %vm261
    %v263 = vsel %vm262, %v255, %v259
    %v264 = vand.u32 2147483647, %v254
    %vm265 = vcmp.eq.f32.partialorder %v264, 8.507059e+37
    %v266 = vand.u32 %v254, 2147483648
    %v267 = vor.u32 1.1754944e-38, %v266
    %v268 = vsel %vm265, %v267, %v263
    %v269 = vmul.f32 1.0, %v268
    %v270 = vtanh.pop %v225
    %v271 = vmul.f32 %v269, %v145
    %273 = vrot.lane.b32.xlu0 %v270, 64
    %v274 = vpop.permute.xlu0 %273
    %v276 = vmul.f32 %v269, %v274
    %278 = vrot.lane.b32.xlu0 %v276, 32
    %v279 = vpop.permute.xlu0 %278
    %v281 = vadd.f32 %v271, %v279
    %v282 = vtanh.pop %v281
    %284 = vrot.lane.b32.xlu0 %v282, 64
    %v285 = vpop.permute.xlu0 %284
    %v287 = vmul.f32 %v269, %v285
    %v288 = vxor.u32 %v250, 2147483648
    %v289 = vmul.f32 %v288, 1.442695
    %v290 = vpow.pop %v289
    %v291 = vadd.f32 %v290, 1.0
    %v292 = vrcp.pop %v291
    %v293 = vmul.f32 %v291, %v292
    %v294 = vsub.f32 1.0, %v293
    %v295 = vmul.f32 %v292, %v294
    %v296 = vadd.f32 %v292, %v295
    %vm297 = vweird.f32 %v291
    %vm298 = vweird.f32 %v292
    %vm299 = vmor %vm297, %vm298
    %v300 = vsel %vm299, %v292, %v296
    %v301 = vand.u32 2147483647, %v291
    %vm302 = vcmp.eq.f32.partialorder %v301, 8.507059e+37
    %v303 = vand.u32 %v291, 2147483648
    %v304 = vor.u32 1.1754944e-38, %v303
    %v305 = vsel %vm302, %v304, %v300
    %v306 = vmul.f32 1.0, %v305
    %v307 = vtanh.pop %v250
    %v308 = vmul.f32 %v306, %v182
    %310 = vrot.lane.b32.xlu0 %v307, 64
    %v311 = vpop.permute.xlu0 %310
    %v313 = vmul.f32 %v306, %v311
    %315 = vrot.lane.b32.xlu0 %v313, 32
    %v316 = vpop.permute.xlu0 %315
    %v318 = vadd.f32 %v308, %v316
    %v319 = vtanh.pop %v318
    %321 = vrot.lane.b32.xlu0 %v319, 64
    %v322 = vpop.permute.xlu0 %321
    %v324 = vmul.f32 %v306, %v322
    %326 = vrot.lane.b32.xlu0 %v287, 32
    %v327 = vpop.permute.xlu0 %326
    %s329 = scalar_lea.vmem [#allocation2], 2
    %330 = vst.msk [vmem:[%s329] sm:$0x3] %vm193, %v327
    %332 = vrot.lane.b32.xlu0 %v324, 32
    %v333 = vpop.permute.xlu0 %332
    %s335 = scalar_lea.vmem [#allocation3], 12
    %336 = vst.msk [vmem:[%s335] sm:$0x3] %vm193, %v333
    %s337 = scalar_lea.vmem [#allocation4], 4
    %v338 = vld [vmem:[%s337] sm:$0x3]
    %v339 = vsel %vm67, %v327, 0
    %341 = vmatpush.msra.mxu0 0.0
    %342 = vmatpush.msra.mxu0 0.0
    %343 = vmatpush.msra.mxu0 0.0
    %344 = vmatpush.msra.mxu0 0.0
    %345 = vmatpush.msra.mxu0 0.0
    %346 = vmatpush.msra.mxu0 0.0
    %347 = vmatpush.msra.mxu0 0.0
    %348 = vmatpush.msra.mxu0 0.0
    %349 = vmatpush.msra.mxu0 0.0
    %350 = vmatpush.msra.mxu0 0.0
    %351 = vmatpush.msra.mxu0 0.0
    %352 = vmatpush.msra.mxu0 0.0
    %353 = vmatpush.msra.mxu0 %v61
    %354 = vmatpush.msra.mxu0 %v60
    %355 = vmatpush.msra.mxu0 %v59
    %356 = vmatpush.msra.mxu0 %v58
    %357 = vmatmul.f32.gmra.mxu0 %v339
    %v358 = vpop.f32.mrf.mxu0
    %v359 = vadd.f32 0.0, %v358
    %360 = vdwg.mxu0
    %v361 = vadd.f32 %v338, %v359
    %s362 = scalar_lea.vmem [#allocation6], 10
    %v363 = vld [vmem:[%s362] sm:$0x3]
    %v364 = vsel %vm67, %v333, 0
    %366 = vmatpush.msra.mxu0 0.0
    %367 = vmatpush.msra.mxu0 0.0
    %368 = vmatpush.msra.mxu0 0.0
    %369 = vmatpush.msra.mxu0 0.0
    %370 = vmatpush.msra.mxu0 0.0
    %371 = vmatpush.msra.mxu0 0.0
    %372 = vmatpush.msra.mxu0 0.0
    %373 = vmatpush.msra.mxu0 0.0
    %374 = vmatpush.msra.mxu0 0.0
    %375 = vmatpush.msra.mxu0 0.0
    %376 = vmatpush.msra.mxu0 0.0
    %377 = vmatpush.msra.mxu0 0.0
    %378 = vmatpush.msra.mxu0 %v65
    %379 = vmatpush.msra.mxu0 %v64
    %380 = vmatpush.msra.mxu0 %v63
    %381 = vmatpush.msra.mxu0 %v62
    %382 = vmatmul.f32.gmra.mxu0 %v364
    %v383 = vpop.f32.mrf.mxu0
    %v384 = vadd.f32 0.0, %v383
    %385 = vdwg.mxu0
    %v386 = vadd.f32 %v363, %v384
    %v387 = vxor.u32 %v361, 2147483648
    %v388 = vmul.f32 %v387, 1.442695
    %v389 = vpow.pop %v388
    %v390 = vadd.f32 %v389, 1.0
    %v391 = vrcp.pop %v390
    %v392 = vmul.f32 %v390, %v391
    %v393 = vsub.f32 1.0, %v392
    %v394 = vmul.f32 %v391, %v393
    %v395 = vadd.f32 %v391, %v394
    %vm396 = vweird.f32 %v390
    %vm397 = vweird.f32 %v391
    %vm398 = vmor %vm396, %vm397
    %v399 = vsel %vm398, %v391, %v395
    %v400 = vand.u32 2147483647, %v390
    %vm401 = vcmp.eq.f32.partialorder %v400, 8.507059e+37
    %v402 = vand.u32 %v390, 2147483648
    %v403 = vor.u32 1.1754944e-38, %v402
    %v404 = vsel %vm401, %v403, %v399
    %v405 = vmul.f32 1.0, %v404
    %v406 = vtanh.pop %v361
    %v407 = vmul.f32 %v405, %v281
    %409 = vrot.lane.b32.xlu0 %v406, 64
    %v410 = vpop.permute.xlu0 %409
    %v412 = vmul.f32 %v405, %v410
    %414 = vrot.lane.b32.xlu0 %v412, 32
    %v415 = vpop.permute.xlu0 %414
    %v417 = vadd.f32 %v407, %v415
    %v418 = vtanh.pop %v417
    %420 = vrot.lane.b32.xlu0 %v418, 64
    %v421 = vpop.permute.xlu0 %420
    %v423 = vmul.f32 %v405, %v421
    %v424 = vxor.u32 %v386, 2147483648
    %v425 = vmul.f32 %v424, 1.442695
    %v426 = vpow.pop %v425
    %v427 = vadd.f32 %v426, 1.0
    %v428 = vrcp.pop %v427
    %v429 = vmul.f32 %v427, %v428
    %v430 = vsub.f32 1.0, %v429
    %v431 = vmul.f32 %v428, %v430
    %v432 = vadd.f32 %v428, %v431
    %vm433 = vweird.f32 %v427
    %vm434 = vweird.f32 %v428
    %vm435 = vmor %vm433, %vm434
    %v436 = vsel %vm435, %v428, %v432
    %v437 = vand.u32 2147483647, %v427
    %vm438 = vcmp.eq.f32.partialorder %v437, 8.507059e+37
    %v439 = vand.u32 %v427, 2147483648
    %v440 = vor.u32 1.1754944e-38, %v439
    %v441 = vsel %vm438, %v440, %v436
    %v442 = vmul.f32 1.0, %v441
    %v443 = vtanh.pop %v386
    %v444 = vmul.f32 %v442, %v318
    %446 = vrot.lane.b32.xlu0 %v443, 64
    %v447 = vpop.permute.xlu0 %446
    %v449 = vmul.f32 %v442, %v447
    %451 = vrot.lane.b32.xlu0 %v449, 32
    %v452 = vpop.permute.xlu0 %451
    %v454 = vadd.f32 %v444, %v452
    %v455 = vtanh.pop %v454
    %457 = vrot.lane.b32.xlu0 %v455, 64
    %v458 = vpop.permute.xlu0 %457
    %v460 = vmul.f32 %v442, %v458
    %462 = vrot.lane.b32.xlu0 %v423, 32
    %v463 = vpop.permute.xlu0 %462
    %s465 = scalar_lea.vmem [#allocation2], 4
    %466 = vst.msk [vmem:[%s465] sm:$0x3] %vm193, %v463
    %468 = vrot.lane.b32.xlu0 %v460, 32
    %v469 = vpop.permute.xlu0 %468
    %s471 = scalar_lea.vmem [#allocation3], 10
    %472 = vst.msk [vmem:[%s471] sm:$0x3] %vm193, %v469
    %s473 = scalar_lea.vmem [#allocation4], 6
    %v474 = vld [vmem:[%s473] sm:$0x3]
    %v475 = vsel %vm67, %v463, 0
    %477 = vmatpush.msra.mxu0 0.0
    %478 = vmatpush.msra.mxu0 0.0
    %479 = vmatpush.msra.mxu0 0.0
    %480 = vmatpush.msra.mxu0 0.0
    %481 = vmatpush.msra.mxu0 0.0
    %482 = vmatpush.msra.mxu0 0.0
    %483 = vmatpush.msra.mxu0 0.0
    %484 = vmatpush.msra.mxu0 0.0
    %485 = vmatpush.msra.mxu0 0.0
    %486 = vmatpush.msra.mxu0 0.0
    %487 = vmatpush.msra.mxu0 0.0
    %488 = vmatpush.msra.mxu0 0.0
    %489 = vmatpush.msra.mxu0 %v61
    %490 = vmatpush.msra.mxu0 %v60
    %491 = vmatpush.msra.mxu0 %v59
    %492 = vmatpush.msra.mxu0 %v58
    %493 = vmatmul.f32.gmra.mxu0 %v475
    %v494 = vpop.f32.mrf.mxu0
    %v495 = vadd.f32 0.0, %v494
    %496 = vdwg.mxu0
    %v497 = vadd.f32 %v474, %v495
    %s498 = scalar_lea.vmem [#allocation6], 8
    %v499 = vld [vmem:[%s498] sm:$0x3]
    %v500 = vsel %vm67, %v469, 0
    %502 = vmatpush.msra.mxu0 0.0
    %503 = vmatpush.msra.mxu0 0.0
    %504 = vmatpush.msra.mxu0 0.0
    %505 = vmatpush.msra.mxu0 0.0
    %506 = vmatpush.msra.mxu0 0.0
    %507 = vmatpush.msra.mxu0 0.0
    %508 = vmatpush.msra.mxu0 0.0
    %509 = vmatpush.msra.mxu0 0.0
    %510 = vmatpush.msra.mxu0 0.0
    %511 = vmatpush.msra.mxu0 0.0
    %512 = vmatpush.msra.mxu0 0.0
    %513 = vmatpush.msra.mxu0 0.0
    %514 = vmatpush.msra.mxu0 %v65
    %515 = vmatpush.msra.mxu0 %v64
    %516 = vmatpush.msra.mxu0 %v63
    %517 = vmatpush.msra.mxu0 %v62
    %518 = vmatmul.f32.gmra.mxu0 %v500
    %v519 = vpop.f32.mrf.mxu0
    %v520 = vadd.f32 0.0, %v519
    %521 = vdwg.mxu0
    %v522 = vadd.f32 %v499, %v520
    %v523 = vxor.u32 %v497, 2147483648
    %v524 = vmul.f32 %v523, 1.442695
    %v525 = vpow.pop %v524
    %v526 = vadd.f32 %v525, 1.0
    %v527 = vrcp.pop %v526
    %v528 = vmul.f32 %v526, %v527
    %v529 = vsub.f32 1.0, %v528
    %v530 = vmul.f32 %v527, %v529
    %v531 = vadd.f32 %v527, %v530
    %vm532 = vweird.f32 %v526
    %vm533 = vweird.f32 %v527
    %vm534 = vmor %vm532, %vm533
    %v535 = vsel %vm534, %v527, %v531
    %v536 = vand.u32 2147483647, %v526
    %vm537 = vcmp.eq.f32.partialorder %v536, 8.507059e+37
    %v538 = vand.u32 %v526, 2147483648
    %v539 = vor.u32 1.1754944e-38, %v538
    %v540 = vsel %vm537, %v539, %v535
    %v541 = vmul.f32 1.0, %v540
    %v542 = vtanh.pop %v497
    %v543 = vmul.f32 %v541, %v417
    %545 = vrot.lane.b32.xlu0 %v542, 64
    %v546 = vpop.permute.xlu0 %545
    %v548 = vmul.f32 %v541, %v546
    %550 = vrot.lane.b32.xlu0 %v548, 32
    %v551 = vpop.permute.xlu0 %550
    %v553 = vadd.f32 %v543, %v551
    %v554 = vtanh.pop %v553
    %556 = vrot.lane.b32.xlu0 %v554, 64
    %v557 = vpop.permute.xlu0 %556
    %v559 = vmul.f32 %v541, %v557
    %v560 = vxor.u32 %v522, 2147483648
    %v561 = vmul.f32 %v560, 1.442695
    %v562 = vpow.pop %v561
    %v563 = vadd.f32 %v562, 1.0
    %v564 = vrcp.pop %v563
    %v565 = vmul.f32 %v563, %v564
    %v566 = vsub.f32 1.0, %v565
    %v567 = vmul.f32 %v564, %v566
    %v568 = vadd.f32 %v564, %v567
    %vm569 = vweird.f32 %v563
    %vm570 = vweird.f32 %v564
    %vm571 = vmor %vm569, %vm570
    %v572 = vsel %vm571, %v564, %v568
    %v573 = vand.u32 2147483647, %v563
    %vm574 = vcmp.eq.f32.partialorder %v573, 8.507059e+37
    %v575 = vand.u32 %v563, 2147483648
    %v576 = vor.u32 1.1754944e-38, %v575
    %v577 = vsel %vm574, %v576, %v572
    %v578 = vmul.f32 1.0, %v577
    %v579 = vtanh.pop %v522
    %v580 = vmul.f32 %v578, %v454
    %582 = vrot.lane.b32.xlu0 %v579, 64
    %v583 = vpop.permute.xlu0 %582
    %v585 = vmul.f32 %v578, %v583
    %587 = vrot.lane.b32.xlu0 %v585, 32
    %v588 = vpop.permute.xlu0 %587
    %v590 = vadd.f32 %v580, %v588
    %v591 = vtanh.pop %v590
    %593 = vrot.lane.b32.xlu0 %v591, 64
    %v594 = vpop.permute.xlu0 %593
    %v596 = vmul.f32 %v578, %v594
    %598 = vrot.lane.b32.xlu0 %v559, 32
    %v599 = vpop.permute.xlu0 %598
    %s601 = scalar_lea.vmem [#allocation2], 6
    %602 = vst.msk [vmem:[%s601] sm:$0x3] %vm193, %v599
    %604 = vrot.lane.b32.xlu0 %v596, 32
    %v605 = vpop.permute.xlu0 %604
    %s607 = scalar_lea.vmem [#allocation3], 8
    %608 = vst.msk [vmem:[%s607] sm:$0x3] %vm193, %v605
    %s609 = scalar_lea.vmem [#allocation4], 8
    %v610 = vld [vmem:[%s609] sm:$0x3]
    %v611 = vsel %vm67, %v599, 0
    %613 = vmatpush.msra.mxu0 0.0
    %614 = vmatpush.msra.mxu0 0.0
    %615 = vmatpush.msra.mxu0 0.0
    %616 = vmatpush.msra.mxu0 0.0
    %617 = vmatpush.msra.mxu0 0.0
    %618 = vmatpush.msra.mxu0 0.0
    %619 = vmatpush.msra.mxu0 0.0
    %620 = vmatpush.msra.mxu0 0.0
    %621 = vmatpush.msra.mxu0 0.0
    %622 = vmatpush.msra.mxu0 0.0
    %623 = vmatpush.msra.mxu0 0.0
    %624 = vmatpush.msra.mxu0 0.0
    %625 = vmatpush.msra.mxu0 %v61
    %626 = vmatpush.msra.mxu0 %v60
    %627 = vmatpush.msra.mxu0 %v59
    %628 = vmatpush.msra.mxu0 %v58
    %629 = vmatmul.f32.gmra.mxu0 %v611
    %v630 = vpop.f32.mrf.mxu0
    %v631 = vadd.f32 0.0, %v630
    %632 = vdwg.mxu0
    %v633 = vadd.f32 %v610, %v631
    %s634 = scalar_lea.vmem [#allocation6], 6
    %v635 = vld [vmem:[%s634] sm:$0x3]
    %v636 = vsel %vm67, %v605, 0
    %638 = vmatpush.msra.mxu0 0.0
    %639 = vmatpush.msra.mxu0 0.0
    %640 = vmatpush.msra.mxu0 0.0
    %641 = vmatpush.msra.mxu0 0.0
    %642 = vmatpush.msra.mxu0 0.0
    %643 = vmatpush.msra.mxu0 0.0
    %644 = vmatpush.msra.mxu0 0.0
    %645 = vmatpush.msra.mxu0 0.0
    %646 = vmatpush.msra.mxu0 0.0
    %647 = vmatpush.msra.mxu0 0.0
    %648 = vmatpush.msra.mxu0 0.0
    %649 = vmatpush.msra.mxu0 0.0
    %650 = vmatpush.msra.mxu0 %v65
    %651 = vmatpush.msra.mxu0 %v64
    %652 = vmatpush.msra.mxu0 %v63
    %653 = vmatpush.msra.mxu0 %v62
    %654 = vmatmul.f32.gmra.mxu0 %v636
    %v655 = vpop.f32.mrf.mxu0
    %v656 = vadd.f32 0.0, %v655
    %657 = vdwg.mxu0
    %v658 = vadd.f32 %v635, %v656
    %v659 = vxor.u32 %v633, 2147483648
    %v660 = vmul.f32 %v659, 1.442695
    %v661 = vpow.pop %v660
    %v662 = vadd.f32 %v661, 1.0
    %v663 = vrcp.pop %v662
    %v664 = vmul.f32 %v662, %v663
    %v665 = vsub.f32 1.0, %v664
    %v666 = vmul.f32 %v663, %v665
    %v667 = vadd.f32 %v663, %v666
    %vm668 = vweird.f32 %v662
    %vm669 = vweird.f32 %v663
    %vm670 = vmor %vm668, %vm669
    %v671 = vsel %vm670, %v663, %v667
    %v672 = vand.u32 2147483647, %v662
    %vm673 = vcmp.eq.f32.partialorder %v672, 8.507059e+37
    %v674 = vand.u32 %v662, 2147483648
    %v675 = vor.u32 1.1754944e-38, %v674
    %v676 = vsel %vm673, %v675, %v671
    %v677 = vmul.f32 1.0, %v676
    %v678 = vtanh.pop %v633
    %v679 = vmul.f32 %v677, %v553
    %681 = vrot.lane.b32.xlu0 %v678, 64
    %v682 = vpop.permute.xlu0 %681
    %v684 = vmul.f32 %v677, %v682
    %686 = vrot.lane.b32.xlu0 %v684, 32
    %v687 = vpop.permute.xlu0 %686
    %v689 = vadd.f32 %v679, %v687
    %v690 = vtanh.pop %v689
    %692 = vrot.lane.b32.xlu0 %v690, 64
    %v693 = vpop.permute.xlu0 %692
    %v695 = vmul.f32 %v677, %v693
    %v696 = vxor.u32 %v658, 2147483648
    %v697 = vmul.f32 %v696, 1.442695
    %v698 = vpow.pop %v697
    %v699 = vadd.f32 %v698, 1.0
    %v700 = vrcp.pop %v699
    %v701 = vmul.f32 %v699, %v700
    %v702 = vsub.f32 1.0, %v701
    %v703 = vmul.f32 %v700, %v702
    %v704 = vadd.f32 %v700, %v703
    %vm705 = vweird.f32 %v699
    %vm706 = vweird.f32 %v700
    %vm707 = vmor %vm705, %vm706
    %v708 = vsel %vm707, %v700, %v704
    %v709 = vand.u32 2147483647, %v699
    %vm710 = vcmp.eq.f32.partialorder %v709, 8.507059e+37
    %v711 = vand.u32 %v699, 2147483648
    %v712 = vor.u32 1.1754944e-38, %v711
    %v713 = vsel %vm710, %v712, %v708
    %v714 = vmul.f32 1.0, %v713
    %v715 = vtanh.pop %v658
    %v716 = vmul.f32 %v714, %v590
    %718 = vrot.lane.b32.xlu0 %v715, 64
    %v719 = vpop.permute.xlu0 %718
    %v721 = vmul.f32 %v714, %v719
    %723 = vrot.lane.b32.xlu0 %v721, 32
    %v724 = vpop.permute.xlu0 %723
    %v726 = vadd.f32 %v716, %v724
    %v727 = vtanh.pop %v726
    %729 = vrot.lane.b32.xlu0 %v727, 64
    %v730 = vpop.permute.xlu0 %729
    %v732 = vmul.f32 %v714, %v730
    %734 = vrot.lane.b32.xlu0 %v695, 32
    %v735 = vpop.permute.xlu0 %734
    %s737 = scalar_lea.vmem [#allocation2], 8
    %738 = vst.msk [vmem:[%s737] sm:$0x3] %vm193, %v735
    %740 = vrot.lane.b32.xlu0 %v732, 32
    %v741 = vpop.permute.xlu0 %740
    %s743 = scalar_lea.vmem [#allocation3], 6
    %744 = vst.msk [vmem:[%s743] sm:$0x3] %vm193, %v741
    %s745 = scalar_lea.vmem [#allocation4], 10
    %v746 = vld [vmem:[%s745] sm:$0x3]
    %v747 = vsel %vm67, %v735, 0
    %749 = vmatpush.msra.mxu0 0.0
    %750 = vmatpush.msra.mxu0 0.0
    %751 = vmatpush.msra.mxu0 0.0
    %752 = vmatpush.msra.mxu0 0.0
    %753 = vmatpush.msra.mxu0 0.0
    %754 = vmatpush.msra.mxu0 0.0
    %755 = vmatpush.msra.mxu0 0.0
    %756 = vmatpush.msra.mxu0 0.0
    %757 = vmatpush.msra.mxu0 0.0
    %758 = vmatpush.msra.mxu0 0.0
    %759 = vmatpush.msra.mxu0 0.0
    %760 = vmatpush.msra.mxu0 0.0
    %761 = vmatpush.msra.mxu0 %v61
    %762 = vmatpush.msra.mxu0 %v60
    %763 = vmatpush.msra.mxu0 %v59
    %764 = vmatpush.msra.mxu0 %v58
    %765 = vmatmul.f32.gmra.mxu0 %v747
    %v766 = vpop.f32.mrf.mxu0
    %v767 = vadd.f32 0.0, %v766
    %768 = vdwg.mxu0
    %v769 = vadd.f32 %v746, %v767
    %s770 = scalar_lea.vmem [#allocation6], 4
    %v771 = vld [vmem:[%s770] sm:$0x3]
    %v772 = vsel %vm67, %v741, 0
    %774 = vmatpush.msra.mxu0 0.0
    %775 = vmatpush.msra.mxu0 0.0
    %776 = vmatpush.msra.mxu0 0.0
    %777 = vmatpush.msra.mxu0 0.0
    %778 = vmatpush.msra.mxu0 0.0
    %779 = vmatpush.msra.mxu0 0.0
    %780 = vmatpush.msra.mxu0 0.0
    %781 = vmatpush.msra.mxu0 0.0
    %782 = vmatpush.msra.mxu0 0.0
    %783 = vmatpush.msra.mxu0 0.0
    %784 = vmatpush.msra.mxu0 0.0
    %785 = vmatpush.msra.mxu0 0.0
    %786 = vmatpush.msra.mxu0 %v65
    %787 = vmatpush.msra.mxu0 %v64
    %788 = vmatpush.msra.mxu0 %v63
    %789 = vmatpush.msra.mxu0 %v62
    %790 = vmatmul.f32.gmra.mxu0 %v772
    %v791 = vpop.f32.mrf.mxu0
    %v792 = vadd.f32 0.0, %v791
    %793 = vdwg.mxu0
    %v794 = vadd.f32 %v771, %v792
    %v795 = vxor.u32 %v769, 2147483648
    %v796 = vmul.f32 %v795, 1.442695
    %v797 = vpow.pop %v796
    %v798 = vadd.f32 %v797, 1.0
    %v799 = vrcp.pop %v798
    %v800 = vmul.f32 %v798, %v799
    %v801 = vsub.f32 1.0, %v800
    %v802 = vmul.f32 %v799, %v801
    %v803 = vadd.f32 %v799, %v802
    %vm804 = vweird.f32 %v798
    %vm805 = vweird.f32 %v799
    %vm806 = vmor %vm804, %vm805
    %v807 = vsel %vm806, %v799, %v803
    %v808 = vand.u32 2147483647, %v798
    %vm809 = vcmp.eq.f32.partialorder %v808, 8.507059e+37
    %v810 = vand.u32 %v798, 2147483648
    %v811 = vor.u32 1.1754944e-38, %v810
    %v812 = vsel %vm809, %v811, %v807
    %v813 = vmul.f32 1.0, %v812
    %v814 = vtanh.pop %v769
    %v815 = vmul.f32 %v813, %v689
    %817 = vrot.lane.b32.xlu0 %v814, 64
    %v818 = vpop.permute.xlu0 %817
    %v820 = vmul.f32 %v813, %v818
    %822 = vrot.lane.b32.xlu0 %v820, 32
    %v823 = vpop.permute.xlu0 %822
    %v825 = vadd.f32 %v815, %v823
    %v826 = vtanh.pop %v825
    %828 = vrot.lane.b32.xlu0 %v826, 64
    %v829 = vpop.permute.xlu0 %828
    %v831 = vmul.f32 %v813, %v829
    %v832 = vxor.u32 %v794, 2147483648
    %v833 = vmul.f32 %v832, 1.442695
    %v834 = vpow.pop %v833
    %v835 = vadd.f32 %v834, 1.0
    %v836 = vrcp.pop %v835
    %v837 = vmul.f32 %v835, %v836
    %v838 = vsub.f32 1.0, %v837
    %v839 = vmul.f32 %v836, %v838
    %v840 = vadd.f32 %v836, %v839
    %vm841 = vweird.f32 %v835
    %vm842 = vweird.f32 %v836
    %vm843 = vmor %vm841, %vm842
    %v844 = vsel %vm843, %v836, %v840
    %v845 = vand.u32 2147483647, %v835
    %vm846 = vcmp.eq.f32.partialorder %v845, 8.507059e+37
    %v847 = vand.u32 %v835, 2147483648
    %v848 = vor.u32 1.1754944e-38, %v847
    %v849 = vsel %vm846, %v848, %v844
    %v850 = vmul.f32 1.0, %v849
    %v851 = vtanh.pop %v794
    %v852 = vmul.f32 %v850, %v726
    %854 = vrot.lane.b32.xlu0 %v851, 64
    %v855 = vpop.permute.xlu0 %854
    %v857 = vmul.f32 %v850, %v855
    %859 = vrot.lane.b32.xlu0 %v857, 32
    %v860 = vpop.permute.xlu0 %859
    %v862 = vadd.f32 %v852, %v860
    %v863 = vtanh.pop %v862
    %865 = vrot.lane.b32.xlu0 %v863, 64
    %v866 = vpop.permute.xlu0 %865
    %v868 = vmul.f32 %v850, %v866
    %870 = vrot.lane.b32.xlu0 %v831, 32
    %v871 = vpop.permute.xlu0 %870
    %s873 = scalar_lea.vmem [#allocation2], 10
    %874 = vst.msk [vmem:[%s873] sm:$0x3] %vm193, %v871
    %876 = vrot.lane.b32.xlu0 %v868, 32
    %v877 = vpop.permute.xlu0 %876
    %s879 = scalar_lea.vmem [#allocation3], 4
    %880 = vst.msk [vmem:[%s879] sm:$0x3] %vm193, %v877
    %s881 = scalar_lea.vmem [#allocation4], 12
    %v882 = vld [vmem:[%s881] sm:$0x3]
    %v883 = vsel %vm67, %v871, 0
    %885 = vmatpush.msra.mxu0 0.0
    %886 = vmatpush.msra.mxu0 0.0
    %887 = vmatpush.msra.mxu0 0.0
    %888 = vmatpush.msra.mxu0 0.0
    %889 = vmatpush.msra.mxu0 0.0
    %890 = vmatpush.msra.mxu0 0.0
    %891 = vmatpush.msra.mxu0 0.0
    %892 = vmatpush.msra.mxu0 0.0
    %893 = vmatpush.msra.mxu0 0.0
    %894 = vmatpush.msra.mxu0 0.0
    %895 = vmatpush.msra.mxu0 0.0
    %896 = vmatpush.msra.mxu0 0.0
    %897 = vmatpush.msra.mxu0 %v61
    %898 = vmatpush.msra.mxu0 %v60
    %899 = vmatpush.msra.mxu0 %v59
    %900 = vmatpush.msra.mxu0 %v58
    %901 = vmatmul.f32.gmra.mxu0 %v883
    %v902 = vpop.f32.mrf.mxu0
    %v903 = vadd.f32 0.0, %v902
    %904 = vdwg.mxu0
    %v905 = vadd.f32 %v882, %v903
    %s906 = scalar_lea.vmem [#allocation6], 2
    %v907 = vld [vmem:[%s906] sm:$0x3]
    %v908 = vsel %vm67, %v877, 0
    %910 = vmatpush.msra.mxu0 0.0
    %911 = vmatpush.msra.mxu0 0.0
    %912 = vmatpush.msra.mxu0 0.0
    %913 = vmatpush.msra.mxu0 0.0
    %914 = vmatpush.msra.mxu0 0.0
    %915 = vmatpush.msra.mxu0 0.0
    %916 = vmatpush.msra.mxu0 0.0
    %917 = vmatpush.msra.mxu0 0.0
    %918 = vmatpush.msra.mxu0 0.0
    %919 = vmatpush.msra.mxu0 0.0
    %920 = vmatpush.msra.mxu0 0.0
    %921 = vmatpush.msra.mxu0 0.0
    %922 = vmatpush.msra.mxu0 %v65
    %923 = vmatpush.msra.mxu0 %v64
    %924 = vmatpush.msra.mxu0 %v63
    %925 = vmatpush.msra.mxu0 %v62
    %926 = vmatmul.f32.gmra.mxu0 %v908
    %v927 = vpop.f32.mrf.mxu0
    %v928 = vadd.f32 0.0, %v927
    %929 = vdwg.mxu0
    %v930 = vadd.f32 %v907, %v928
    %v931 = vxor.u32 %v905, 2147483648
    %v932 = vmul.f32 %v931, 1.442695
    %v933 = vpow.pop %v932
    %v934 = vadd.f32 %v933, 1.0
    %v935 = vrcp.pop %v934
    %v936 = vmul.f32 %v934, %v935
    %v937 = vsub.f32 1.0, %v936
    %v938 = vmul.f32 %v935, %v937
    %v939 = vadd.f32 %v935, %v938
    %vm940 = vweird.f32 %v934
    %vm941 = vweird.f32 %v935
    %vm942 = vmor %vm940, %vm941
    %v943 = vsel %vm942, %v935, %v939
    %v944 = vand.u32 2147483647, %v934
    %vm945 = vcmp.eq.f32.partialorder %v944, 8.507059e+37
    %v946 = vand.u32 %v934, 2147483648
    %v947 = vor.u32 1.1754944e-38, %v946
    %v948 = vsel %vm945, %v947, %v943
    %v949 = vmul.f32 1.0, %v948
    %v950 = vtanh.pop %v905
    %v951 = vmul.f32 %v949, %v825
    %953 = vrot.lane.b32.xlu0 %v950, 64
    %v954 = vpop.permute.xlu0 %953
    %v956 = vmul.f32 %v949, %v954
    %958 = vrot.lane.b32.xlu0 %v956, 32
    %v959 = vpop.permute.xlu0 %958
    %v961 = vadd.f32 %v951, %v959
    %v962 = vtanh.pop %v961
    %964 = vrot.lane.b32.xlu0 %v962, 64
    %v965 = vpop.permute.xlu0 %964
    %v967 = vmul.f32 %v949, %v965
    %v968 = vxor.u32 %v930, 2147483648
    %v969 = vmul.f32 %v968, 1.442695
    %v970 = vpow.pop %v969
    %v971 = vadd.f32 %v970, 1.0
    %v972 = vrcp.pop %v971
    %v973 = vmul.f32 %v971, %v972
    %v974 = vsub.f32 1.0, %v973
    %v975 = vmul.f32 %v972, %v974
    %v976 = vadd.f32 %v972, %v975
    %vm977 = vweird.f32 %v971
    %vm978 = vweird.f32 %v972
    %vm979 = vmor %vm977, %vm978
    %v980 = vsel %vm979, %v972, %v976
    %v981 = vand.u32 2147483647, %v971
    %vm982 = vcmp.eq.f32.partialorder %v981, 8.507059e+37
    %v983 = vand.u32 %v971, 2147483648
    %v984 = vor.u32 1.1754944e-38, %v983
    %v985 = vsel %vm982, %v984, %v980
    %v986 = vmul.f32 1.0, %v985
    %v987 = vtanh.pop %v930
    %v988 = vmul.f32 %v986, %v862
    %990 = vrot.lane.b32.xlu0 %v987, 64
    %v991 = vpop.permute.xlu0 %990
    %v993 = vmul.f32 %v986, %v991
    %995 = vrot.lane.b32.xlu0 %v993, 32
    %v996 = vpop.permute.xlu0 %995
    %v998 = vadd.f32 %v988, %v996
    %v999 = vtanh.pop %v998
    %1001 = vrot.lane.b32.xlu0 %v999, 64
    %v1002 = vpop.permute.xlu0 %1001
    %v1004 = vmul.f32 %v986, %v1002
    %1006 = vrot.lane.b32.xlu0 %v967, 32
    %v1007 = vpop.permute.xlu0 %1006
    %s1009 = scalar_lea.vmem [#allocation2], 12
    %1010 = vst.msk [vmem:[%s1009] sm:$0x3] %vm193, %v1007
    %1012 = vrot.lane.b32.xlu0 %v1004, 32
    %v1013 = vpop.permute.xlu0 %1012
    %s1015 = scalar_lea.vmem [#allocation3], 2
    %1016 = vst.msk [vmem:[%s1015] sm:$0x3] %vm193, %v1013
    %s1017 = scalar_lea.vmem [#allocation4], 14
    %v1018 = vld [vmem:[%s1017] sm:$0x3]
    %v1019 = vsel %vm67, %v1007, 0
    %1021 = vmatpush.msra.mxu0 0.0
    %1022 = vmatpush.msra.mxu0 0.0
    %1023 = vmatpush.msra.mxu0 0.0
    %1024 = vmatpush.msra.mxu0 0.0
    %1025 = vmatpush.msra.mxu0 0.0
    %1026 = vmatpush.msra.mxu0 0.0
    %1027 = vmatpush.msra.mxu0 0.0
    %1028 = vmatpush.msra.mxu0 0.0
    %1029 = vmatpush.msra.mxu0 0.0
    %1030 = vmatpush.msra.mxu0 0.0
    %1031 = vmatpush.msra.mxu0 0.0
    %1032 = vmatpush.msra.mxu0 0.0
    %1033 = vmatpush.msra.mxu0 %v61
    %1034 = vmatpush.msra.mxu0 %v60
    %1035 = vmatpush.msra.mxu0 %v59
    %1036 = vmatpush.msra.mxu0 %v58
    %1037 = vmatmul.f32.gmra.mxu0 %v1019
    %v1038 = vpop.f32.mrf.mxu0
    %v1039 = vadd.f32 0.0, %v1038
    %1040 = vdwg.mxu0
    %v1041 = vadd.f32 %v1018, %v1039
    %v1042 = vld [vmem:[#allocation6] sm:$0x3]
    %v1043 = vsel %vm67, %v1013, 0
    %1045 = vmatpush.msra.mxu0 0.0
    %1046 = vmatpush.msra.mxu0 0.0
    %1047 = vmatpush.msra.mxu0 0.0
    %1048 = vmatpush.msra.mxu0 0.0
    %1049 = vmatpush.msra.mxu0 0.0
    %1050 = vmatpush.msra.mxu0 0.0
    %1051 = vmatpush.msra.mxu0 0.0
    %1052 = vmatpush.msra.mxu0 0.0
    %1053 = vmatpush.msra.mxu0 0.0
    %1054 = vmatpush.msra.mxu0 0.0
    %1055 = vmatpush.msra.mxu0 0.0
    %1056 = vmatpush.msra.mxu0 0.0
    %1057 = vmatpush.msra.mxu0 %v65
    %1058 = vmatpush.msra.mxu0 %v64
    %1059 = vmatpush.msra.mxu0 %v63
    %1060 = vmatpush.msra.mxu0 %v62
    %1061 = vmatmul.f32.gmra.mxu0 %v1043
    %v1062 = vpop.f32.mrf.mxu0
    %v1063 = vadd.f32 0.0, %v1062
    %1064 = vdwg.mxu0
    %v1065 = vadd.f32 %v1042, %v1063
    %v1066 = vxor.u32 %v1041, 2147483648
    %v1067 = vmul.f32 %v1066, 1.442695
    %v1068 = vpow.pop %v1067
    %v1069 = vadd.f32 %v1068, 1.0
    %v1070 = vrcp.pop %v1069
    %v1071 = vmul.f32 %v1069, %v1070
    %v1072 = vsub.f32 1.0, %v1071
    %v1073 = vmul.f32 %v1070, %v1072
    %v1074 = vadd.f32 %v1070, %v1073
    %vm1075 = vweird.f32 %v1069
    %vm1076 = vweird.f32 %v1070
    %vm1077 = vmor %vm1075, %vm1076
    %v1078 = vsel %vm1077, %v1070, %v1074
    %v1079 = vand.u32 2147483647, %v1069
    %vm1080 = vcmp.eq.f32.partialorder %v1079, 8.507059e+37
    %v1081 = vand.u32 %v1069, 2147483648
    %v1082 = vor.u32 1.1754944e-38, %v1081
    %v1083 = vsel %vm1080, %v1082, %v1078
    %v1084 = vmul.f32 1.0, %v1083
    %v1085 = vtanh.pop %v1041
    %v1086 = vmul.f32 %v1084, %v961
    %1088 = vrot.lane.b32.xlu0 %v1085, 64
    %v1089 = vpop.permute.xlu0 %1088
    %v1091 = vmul.f32 %v1084, %v1089
    %1093 = vrot.lane.b32.xlu0 %v1091, 32
    %v1094 = vpop.permute.xlu0 %1093
    %v1096 = vadd.f32 %v1086, %v1094
    %v1097 = vtanh.pop %v1096
    %1099 = vrot.lane.b32.xlu0 %v1097, 64
    %v1100 = vpop.permute.xlu0 %1099
    %v1102 = vmul.f32 %v1084, %v1100
    %v1103 = vxor.u32 %v1065, 2147483648
    %v1104 = vmul.f32 %v1103, 1.442695
    %v1105 = vpow.pop %v1104
    %v1106 = vadd.f32 %v1105, 1.0
    %v1107 = vrcp.pop %v1106
    %v1108 = vmul.f32 %v1106, %v1107
    %v1109 = vsub.f32 1.0, %v1108
    %v1110 = vmul.f32 %v1107, %v1109
    %v1111 = vadd.f32 %v1107, %v1110
    %vm1112 = vweird.f32 %v1106
    %vm1113 = vweird.f32 %v1107
    %vm1114 = vmor %vm1112, %vm1113
    %v1115 = vsel %vm1114, %v1107, %v1111
    %v1116 = vand.u32 2147483647, %v1106
    %vm1117 = vcmp.eq.f32.partialorder %v1116, 8.507059e+37
    %v1118 = vand.u32 %v1106, 2147483648
    %v1119 = vor.u32 1.1754944e-38, %v1118
    %v1120 = vsel %vm1117, %v1119, %v1115
    %v1121 = vmul.f32 1.0, %v1120
    %v1122 = vtanh.pop %v1065
    %v1123 = vmul.f32 %v1121, %v998
    %1125 = vrot.lane.b32.xlu0 %v1122, 64
    %v1126 = vpop.permute.xlu0 %1125
    %v1128 = vmul.f32 %v1121, %v1126
    %1130 = vrot.lane.b32.xlu0 %v1128, 32
    %v1131 = vpop.permute.xlu0 %1130
    %v1133 = vadd.f32 %v1123, %v1131
    %v1134 = vtanh.pop %v1133
    %1136 = vrot.lane.b32.xlu0 %v1134, 64
    %v1137 = vpop.permute.xlu0 %1136
    %v1139 = vmul.f32 %v1121, %v1137
    %1141 = vrot.lane.b32.xlu0 %v1102, 32
    %v1142 = vpop.permute.xlu0 %1141
    %s1144 = scalar_lea.vmem [#allocation2], 14
    %1145 = vst.msk [vmem:[%s1144] sm:$0x3] %vm193, %v1142
    %1147 = vrot.lane.b32.xlu0 %v1139, 32
    %v1148 = vpop.permute.xlu0 %1147
    %1150 = vst.msk [vmem:[#allocation3] sm:$0x3] %vm193, %v1148
    %v1151 = vld [vmem:[#allocation2] sm:$0x3]
    %v1152 = vld [vmem:[#allocation2 + $0x2] sm:$0x3]
    %v1153 = vld [vmem:[#allocation2 + $0x4] sm:$0x3]
    %v1154 = vld [vmem:[#allocation2 + $0x6] sm:$0x3]
    %v1155 = vld [vmem:[#allocation2 + $0x8] sm:$0x3]
    %v1156 = vld [vmem:[#allocation2 + $0xa] sm:$0x3]
    %v1157 = vld [vmem:[#allocation2 + $0xc] sm:$0x3]
    %v1158 = vld [vmem:[#allocation2 + $0xe] sm:$0x3]
    %v1159 = vld [vmem:[#allocation3] sm:$0x3]
    %v1160 = vld [vmem:[#allocation3 + $0x2] sm:$0x3]
    %v1161 = vld [vmem:[#allocation3 + $0x4] sm:$0x3]
    %v1162 = vld [vmem:[#allocation3 + $0x6] sm:$0x3]
    %v1163 = vld [vmem:[#allocation3 + $0x8] sm:$0x3]
    %v1164 = vld [vmem:[#allocation3 + $0xa] sm:$0x3]
    %v1165 = vld [vmem:[#allocation3 + $0xc] sm:$0x3]
    %v1166 = vld [vmem:[#allocation3 + $0xe] sm:$0x3]
    %v1167 = vld [vmem:[%s4] sm:$0xff]
    %v1168 = vld [vmem:[%s4 + $0x8] sm:$0xff]
    %v1169 = vld [vmem:[%s4 + $0x10] sm:$0xff]
    %v1170 = vld [vmem:[%s4 + $0x18] sm:$0xff]
    %v1171 = vld [vmem:[%s5] sm:$0xff]
    %v1172 = vld [vmem:[%s5 + $0x8] sm:$0xff]
    %v1173 = vld [vmem:[%s5 + $0x10] sm:$0xff]
    %v1174 = vld [vmem:[%s5 + $0x18] sm:$0xff]
    %1183 = vst [vmem:[#allocation1] ss:$4 sm:$0xff] %v1159
    %s1184 = scalar_lea.vmem [#allocation1], 1
    %1185 = vst [vmem:[%s1184] ss:$4 sm:$0xff] %v1160
    %s1186 = scalar_lea.vmem [#allocation1], 2
    %1187 = vst [vmem:[%s1186] ss:$4 sm:$0xff] %v1161
    %s1188 = scalar_lea.vmem [#allocation1], 3
    %1189 = vst [vmem:[%s1188] ss:$4 sm:$0xff] %v1162
    %s1190 = scalar_lea.vmem [#allocation1], 32
    %1191 = vst [vmem:[%s1190] ss:$4 sm:$0xff] %v1163
    %s1192 = scalar_lea.vmem [#allocation1], 33
    %1193 = vst [vmem:[%s1192] ss:$4 sm:$0xff] %v1164
    %s1194 = scalar_lea.vmem [#allocation1], 34
    %1195 = vst [vmem:[%s1194] ss:$4 sm:$0xff] %v1165
    %s1196 = scalar_lea.vmem [#allocation1], 35
    %1197 = vst [vmem:[%s1196] ss:$4 sm:$0xff] %v1166
    %v1198 = vld.sshfl [vmem:[#allocation1] sm:$0xff pattern:$0x73625140]
    %v1199 = vld.sshfl [vmem:[#allocation1 + $0x20] sm:$0xff pattern:$0x73625140]
    %v1200 = vsel %vm67, %v1198, 0
    %v1202 = vsel %vm67, %v1199, 0
    %1204 = vmatpush.msra.mxu0 0.0
    %1205 = vmatpush.msra.mxu0 0.0
    %1206 = vmatpush.msra.mxu0 0.0
    %1207 = vmatpush.msra.mxu0 0.0
    %1208 = vmatpush.msra.mxu0 0.0
    %1209 = vmatpush.msra.mxu0 0.0
    %1210 = vmatpush.msra.mxu0 0.0
    %1211 = vmatpush.msra.mxu0 0.0
    %1212 = vmatpush.msra.mxu0 0.0
    %1213 = vmatpush.msra.mxu0 0.0
    %1214 = vmatpush.msra.mxu0 0.0
    %1215 = vmatpush.msra.mxu0 0.0
    %1216 = vmatpush.msra.mxu0 %v1174
    %1217 = vmatpush.msra.mxu0 %v1173
    %1218 = vmatpush.msra.mxu0 %v1172
    %1219 = vmatpush.msra.mxu0 %v1171
    %1220 = vmatmul.f32.gmra.mxu0 %v1200
    %v1221 = vpop.f32.mrf.mxu0
    %v1222 = vadd.f32 0.0, %v1221
    %1223 = vmatmul.f32.gmra.mxu0 %v1202
    %v1224 = vpop.f32.mrf.mxu0
    %v1225 = vadd.f32 0.0, %v1224
    %1226 = vdwg.mxu0
    %1235 = vst [vmem:[#allocation1] ss:$4 sm:$0xff] %v1151
    %s1236 = scalar_lea.vmem [#allocation1], 1
    %1237 = vst [vmem:[%s1236] ss:$4 sm:$0xff] %v1152
    %s1238 = scalar_lea.vmem [#allocation1], 2
    %1239 = vst [vmem:[%s1238] ss:$4 sm:$0xff] %v1153
    %s1240 = scalar_lea.vmem [#allocation1], 3
    %1241 = vst [vmem:[%s1240] ss:$4 sm:$0xff] %v1154
    %s1242 = scalar_lea.vmem [#allocation1], 32
    %1243 = vst [vmem:[%s1242] ss:$4 sm:$0xff] %v1155
    %s1244 = scalar_lea.vmem [#allocation1], 33
    %1245 = vst [vmem:[%s1244] ss:$4 sm:$0xff] %v1156
    %s1246 = scalar_lea.vmem [#allocation1], 34
    %1247 = vst [vmem:[%s1246] ss:$4 sm:$0xff] %v1157
    %s1248 = scalar_lea.vmem [#allocation1], 35
    %1249 = vst [vmem:[%s1248] ss:$4 sm:$0xff] %v1158
    %v1250 = vld.sshfl [vmem:[#allocation1] sm:$0xff pattern:$0x73625140]
    %v1251 = vld.sshfl [vmem:[#allocation1 + $0x20] sm:$0xff pattern:$0x73625140]
    %v1252 = vsel %vm67, %v1250, 0
    %v1254 = vsel %vm67, %v1251, 0
    %1256 = vmatpush.msra.mxu0 0.0
    %1257 = vmatpush.msra.mxu0 0.0
    %1258 = vmatpush.msra.mxu0 0.0
    %1259 = vmatpush.msra.mxu0 0.0
    %1260 = vmatpush.msra.mxu0 0.0
    %1261 = vmatpush.msra.mxu0 0.0
    %1262 = vmatpush.msra.mxu0 0.0
    %1263 = vmatpush.msra.mxu0 0.0
    %1264 = vmatpush.msra.mxu0 0.0
    %1265 = vmatpush.msra.mxu0 0.0
    %1266 = vmatpush.msra.mxu0 0.0
    %1267 = vmatpush.msra.mxu0 0.0
    %1268 = vmatpush.msra.mxu0 %v1170
    %1269 = vmatpush.msra.mxu0 %v1169
    %1270 = vmatpush.msra.mxu0 %v1168
    %1271 = vmatpush.msra.mxu0 %v1167
    %1272 = vmatmul.f32.gmra.mxu0 %v1252
    %v1273 = vpop.f32.mrf.mxu0
    %v1274 = vadd.f32 %v1222, %v1273
    %1275 = vmatmul.f32.gmra.mxu0 %v1254
    %v1276 = vpop.f32.mrf.mxu0
    %v1277 = vadd.f32 %v1225, %v1276
    %1278 = vdwg.mxu0
    %v1279 = vld [vmem:[%s6] sm:$0x1]
    %v1281 = vperm.slane %v1279, 0
    %v1283 = vadd.f32 %v1274, %v1281
    %v1284 = vadd.f32 %v1277, %v1281
    %v1287 = vrot.slane %v1283, 2
    %v1288 = vrot.slane %v1283, 4
    %v1289 = vrot.slane %v1283, 6
    %v1290 = vrot.slane %v1284, 2
    %v1291 = vrot.slane %v1284, 4
    %v1292 = vrot.slane %v1284, 6
    %vm1299 = vcmask 25600
    %1300 = vst.msk [vmem:[%s7] sm:$0x3] %vm1299, %v1283
    %1301 = vst.msk [vmem:[%s7 + $0x2] sm:$0x3] %vm1299, %v1287
    %1302 = vst.msk [vmem:[%s7 + $0x4] sm:$0x3] %vm1299, %v1288
    %1303 = vst.msk [vmem:[%s7 + $0x6] sm:$0x3] %vm1299, %v1289
    %1304 = vst.msk [vmem:[%s7 + $0x8] sm:$0x3] %vm1299, %v1284
    %1305 = vst.msk [vmem:[%s7 + $0xa] sm:$0x3] %vm1299, %v1290
    %1306 = vst.msk [vmem:[%s7 + $0xc] sm:$0x3] %vm1299, %v1291
    %1307 = vst.msk [vmem:[%s7 + $0xe] sm:$0x3] %vm1299, %v1292
    // Predicated region
    $region38: #{tpu_custom_call.1} parent=1 // pred_check
      _
    $region39: #{tpu_custom_call.1} parent=1 // pred_check_branch
      %1309 = sbr.rel (0) target = $region41
    $region40: #{tpu_custom_call.1} parent=1 // pred_region
      _
    $region41: #{tpu_custom_call.1} parent=1 // pred_fallthru
      _
    // Predicated region
    $region42: #{tpu_custom_call.1} parent=1 // pred_check
      _
    $region43: #{tpu_custom_call.1} parent=1 // pred_check_branch
      %1311 = sbr.rel (0) target = $region45
    $region44: #{tpu_custom_call.1} parent=1 // pred_region
      _
    $region45: #{tpu_custom_call.1} parent=1 // pred_fallthru
      _
    %1312 = vsyncpa [#allocation5], 1
    %1313 = vsyncpa [#allocation7], 1

</llo_original>
